<compile_context>
chip_gen: v6e
topology: v6e:2x2x1
jax: 0.10.0
libtpu: 0.0.40
codegen_flags: <defaults>
</compile_context>

<pallas_src>
import functools
import math

import jax
import jax.numpy as jnp
from jax import lax
from jax.experimental import pallas as pl
from jax.experimental.pallas import tpu as pltpu


def _project(x, w, b):
    """x: (L, D) activation rows; w: (D, D) PyTorch (out, in); b: (D, 1).

    Returns the projection in weight-major orientation (D, L):
      proj_t[j, s] = sum_d w[j, d] * x[s, d] + b[j]
    """
    return lax.dot_general(
        w, x,
        dimension_numbers=(((1,), (1,)), ((), ())),
        preferred_element_type=jnp.float32,
    ) + b


def _mha_body(q, k, v, wq, bq, wk, bk, wv, bv, *, num_heads, d_k):
    """q: (tq, D); k, v: (S, D). Returns (ctx_dense (tq, D), attn (H, tq, S)), float32."""
    tq = q.shape[0]
    S = k.shape[0]

    # Projections stay weight-major (H, d_k, len); the 1/sqrt(d_k) scale is already folded
    # into wq/bq by the wrapper, so no in-kernel scale multiply or Q transpose is needed.
    q_t = _project(q, wq, bq).reshape(num_heads, d_k, tq)   # (H, d_k, tq)
    k_t = _project(k, wk, bk).reshape(num_heads, d_k, S)    # (H, d_k, S)
    v_t = _project(v, wv, bv).reshape(num_heads, d_k, S)    # (H, d_k, S)

    # scores[h, q, k] = sum_c q_t[h, c, q] * k_t[h, c, k]
    scores = lax.dot_general(
        q_t, k_t,
        dimension_numbers=(((1,), (1,)), ((0,), (0,))),
        preferred_element_type=jnp.float32,
    )                                                       # (H, tq, S)

    # Numerically-stable softmax; one exact reciprocal per row, then a multiply.
    m = jnp.max(scores, axis=-1, keepdims=True)
    e = jnp.exp(scores - m)
    denom = jnp.sum(e, axis=-1, keepdims=True)
    attn = e * pl.reciprocal(denom, approx=False)           # (H, tq, S)

    # ctx[h, q, c] = sum_k attn[h, q, k] * v_t[h, c, k]
    ctx = lax.dot_general(
        attn, v_t,
        dimension_numbers=(((2,), (2,)), ((0,), (0,))),
        preferred_element_type=jnp.float32,
    )                                                       # (H, tq, d_k)

    # Lane-dense relayout inside the kernel: (H, tq, d_k) -> (tq, H*d_k) by concatenating
    # the per-head tiles along the lane axis. Replaces the wrapper-side transpose+reshape
    # HBM round trip and makes the output store a full-width block write.
    ctx_dense = jnp.concatenate([ctx[h] for h in range(num_heads)], axis=-1)  # (tq, D)
    return ctx_dense, attn


def attention_kernel(q_ref, k_ref, v_ref, wq_ref, bq_ref, wk_ref, bk_ref, wv_ref, bv_ref,
                     out_ref, attn_ref, *, num_heads, d_k):
    ctx, attn = _mha_body(q_ref[0], k_ref[0], v_ref[0],
                          wq_ref[...], bq_ref[...], wk_ref[...], bk_ref[...],
                          wv_ref[...], bv_ref[...], num_heads=num_heads, d_k=d_k)
    out_ref[0] = ctx      # single lane-dense (tq, D) block write
    attn_ref[0] = attn    # single full (H, tq, S) block write


def attention_kernel_no_attn(q_ref, k_ref, v_ref, wq_ref, bq_ref, wk_ref, bk_ref,
                             wv_ref, bv_ref, out_ref, *, num_heads, d_k):
    ctx, _ = _mha_body(q_ref[0], k_ref[0], v_ref[0],
                       wq_ref[...], bq_ref[...], wk_ref[...], bk_ref[...],
                       wv_ref[...], bv_ref[...], num_heads=num_heads, d_k=d_k)
    out_ref[0] = ctx


def _pick_q_tile(S, q_block):
    """Largest query tile <= q_block that divides S and keeps the blocks (8,128)-legal."""
    if S <= q_block:
        return S
    for t in range(min(q_block, S), 7, -1):
        if S % t == 0 and t % 8 == 0:
            return t
    return S


def single_head_attention(query, key, value, wq, bq, wk, bk, wv, bv, num_heads,
                          *, return_attention=True, q_block=256):
    """query/key/value: (B, S, D); wq/wk/wv: (D, D) PyTorch convention (out, in); b*: (D,)."""
    B, S, D = query.shape
    assert D % num_heads == 0, "d_model must be divisible by num_heads"
    d_k = D // num_heads
    scale = 1.0 / math.sqrt(d_k)

    query = query.astype(jnp.float32)
    key = key.astype(jnp.float32)
    value = value.astype(jnp.float32)

    # Fold the 1/sqrt(d_k) scale into the Q projection parameters (tiny tensors, fused by
    # XLA once) -> deletes an in-kernel VPU multiply over H*S*d_k and the Q transpose.
    wq_s = wq.astype(jnp.float32) * scale
    bq_s = (bq.astype(jnp.float32) * scale).reshape(D, 1)
    wk_f = wk.astype(jnp.float32)
    bk_f = bk.astype(jnp.float32).reshape(D, 1)
    wv_f = wv.astype(jnp.float32)
    bv_f = bv.astype(jnp.float32).reshape(D, 1)

    tq = _pick_q_tile(S, q_block)
    n_q = S // tq

    q_spec = pl.BlockSpec((1, tq, D), lambda b, qi: (b, qi, 0))
    kv_spec = pl.BlockSpec((1, S, D), lambda b, qi: (b, 0, 0))
    # Grid-invariant (constant-index) parameter blocks; Pallas only re-fetches on change.
    # TODO(synk): pipeline_mode=pl.Buffered(1) + bf16 weights would halve their residency
    #             at very large D (>~2048) on v7x; not needed at these shapes/tolerance.
    w_spec = pl.BlockSpec((D, D), lambda b, qi: (0, 0))
    bias_spec = pl.BlockSpec((D, 1), lambda b, qi: (0, 0))
    out_spec = pl.BlockSpec((1, tq, D), lambda b, qi: (b, qi, 0))

    # Advisory cost estimate so XLA schedules around the custom call correctly.
    flops = 2 * B * (3 * S * D * D + 2 * num_heads * S * S * d_k)
    transcendentals = B * num_heads * S * S
    bytes_accessed = 4 * (3 * B * S * D + 3 * D * D + 3 * D + B * S * D
                          + (B * num_heads * S * S if return_attention else 0))
    cost = pl.CostEstimate(flops=flops, transcendentals=transcendentals,
                           bytes_accessed=bytes_accessed)

    # Explicit VMEM budget: pipelined blocks (double-buffered) + in-kernel temporaries,
    # with 2x headroom, capped at v7x's 64 MiB physical VMEM.
    f32 = 4
    block_bytes = f32 * (2 * tq * D            # q block
                         + 2 * 2 * S * D       # k + v blocks
                         + 2 * tq * D          # out block
                         + 2 * 3 * D * D       # weights
                         + 2 * 3 * D           # biases
                         + (2 * num_heads * tq * S if return_attention else 0))
    temp_bytes = f32 * (3 * num_heads * tq * S      # scores / e / attn
                        + (2 * S + tq) * D          # projected q/k/v
                        + 2 * tq * D)               # ctx + lane-dense relayout
    vmem_limit = int(min(64 * 1024 * 1024,
                         max(8 * 1024 * 1024, 2 * (block_bytes + temp_bytes))))

    common = dict(
        grid=(B, n_q),
        in_specs=[q_spec, kv_spec, kv_spec,
                  w_spec, bias_spec, w_spec, bias_spec, w_spec, bias_spec],
        compiler_params=pltpu.CompilerParams(
            dimension_semantics=("parallel", "parallel"),
            vmem_limit_bytes=vmem_limit),
        cost_estimate=cost,
    )
    args = (query, key, value, wq_s, bq_s, wk_f, bk_f, wv_f, bv_f)

    if return_attention:
        kernel = functools.partial(attention_kernel, num_heads=num_heads, d_k=d_k)
        out, attn = pl.pallas_call(
            kernel,
            out_shape=(jax.ShapeDtypeStruct((B, S, D), jnp.float32),
                       jax.ShapeDtypeStruct((B, num_heads, S, S), jnp.float32)),
            out_specs=(out_spec,
                       pl.BlockSpec((1, num_heads, tq, S), lambda b, qi: (b, 0, qi, 0))),
            **common,
        )(*args)
    else:
        kernel = functools.partial(attention_kernel_no_attn, num_heads=num_heads, d_k=d_k)
        out = pl.pallas_call(
            kernel,
            out_shape=jax.ShapeDtypeStruct((B, S, D), jnp.float32),
            out_specs=out_spec,
            **common,
        )(*args)
        attn = None

    return out, attn


def reference(query, key, value, wq, bq, wk, bk, wv, bv, num_heads):
    """Pure-JAX re-implementation of the PyTorch forward for validation."""
    B, S, D = query.shape
    d_k = D // num_heads
    Q = (query @ wq.T + bq).reshape(B, S, num_heads, d_k).transpose(0, 2, 1, 3)
    K = (key @ wk.T + bk).reshape(B, S, num_heads, d_k).transpose(0, 2, 1, 3)
    V = (value @ wv.T + bv).reshape(B, S, num_heads, d_k).transpose(0, 2, 1, 3)
    scores = jnp.einsum("bhqd,bhkd->bhqk", Q, K) / jnp.sqrt(jnp.float32(d_k))
    attn = jax.nn.softmax(scores, axis=-1)
    out = jnp.einsum("bhqk,bhkd->bhqd", attn, V)
    out = out.transpose(0, 2, 1, 3).reshape(B, S, D)
    return out, attn


if __name__ == "__main__":
    B, S, D, H = 2, 8, 32, 4  # batch, seq_len, d_model, num_heads -> d_k = 8

    key0 = jax.random.PRNGKey(0)
    ks = jax.random.split(key0, 9)
    query = jax.random.normal(ks[0], (B, S, D), dtype=jnp.float32)
    keyt = jax.random.normal(ks[1], (B, S, D), dtype=jnp.float32)
    value = jax.random.normal(ks[2], (B, S, D), dtype=jnp.float32)

    # Deterministic parameter init (PyTorch Linear weight shape: (out_features, in_features)).
    init_scale = 1.0 / jnp.sqrt(jnp.float32(D))
    wq = jax.random.uniform(ks[3], (D, D), jnp.float32, -init_scale, init_scale)
    wk = jax.random.uniform(ks[4], (D, D), jnp.float32, -init_scale, init_scale)
    wv = jax.random.uniform(ks[5], (D, D), jnp.float32, -init_scale, init_scale)
    bq = jax.random.uniform(ks[6], (D,), jnp.float32, -init_scale, init_scale)
    bk = jax.random.uniform(ks[7], (D,), jnp.float32, -init_scale, init_scale)
    bv = jax.random.uniform(ks[8], (D,), jnp.float32, -init_scale, init_scale)

    out, attn = single_head_attention(query, keyt, value, wq, bq, wk, bk, wv, bv, H)
    out = jax.block_until_ready(out)
    attn = jax.block_until_ready(attn)

    out_ref, attn_ref = reference(query, keyt, value, wq, bq, wk, bk, wv, bv, H)
    assert out.shape == (B, S, D) and attn.shape == (B, H, S, S)
    assert jnp.allclose(out, out_ref, atol=1e-5, rtol=1e-5)
    assert jnp.allclose(attn, attn_ref, atol=1e-5, rtol=1e-5)

    # Cheaper path that skips the O(H*S^2) attention-weights writeback entirely.
    out2, none_attn = single_head_attention(query, keyt, value, wq, bq, wk, bk, wv, bv, H,
                                            return_attention=False)
    out2 = jax.block_until_ready(out2)
    assert none_attn is None
    assert jnp.allclose(out2, out_ref, atol=1e-5, rtol=1e-5)

    print("KERNEL_OK")
</pallas_src>

<mosaic_0001>
module attributes {stable_mosaic.version = 11 : i64} {
  func.func @attention_kernel(%arg0: i32, %arg1: i32, %arg2: memref<1x8x32xf32, #tpu.memory_space<vmem>>, %arg3: memref<1x8x32xf32, #tpu.memory_space<vmem>>, %arg4: memref<1x8x32xf32, #tpu.memory_space<vmem>>, %arg5: memref<32x32xf32, #tpu.memory_space<vmem>>, %arg6: memref<32x1xf32, #tpu.memory_space<vmem>>, %arg7: memref<32x32xf32, #tpu.memory_space<vmem>>, %arg8: memref<32x1xf32, #tpu.memory_space<vmem>>, %arg9: memref<32x32xf32, #tpu.memory_space<vmem>>, %arg10: memref<32x1xf32, #tpu.memory_space<vmem>>, %arg11: memref<1x8x32xf32, #tpu.memory_space<vmem>>, %arg12: memref<1x4x8x8xf32, #tpu.memory_space<vmem>>) attributes {dimension_semantics = [#tpu.dimension_semantics<parallel>, #tpu.dimension_semantics<parallel>], iteration_bounds = array<i64: 2, 1>, scalar_prefetch = 0 : i64, scratch_operands = 0 : i64, tpu.core_type = #tpu.core_type<tc>, window_params = [{transform_indices = @transform_0, window_bounds = array<i64: 1, 8, 32>}, {transform_indices = @transform_1, window_bounds = array<i64: 1, 8, 32>}, {transform_indices = @transform_2, window_bounds = array<i64: 1, 8, 32>}, {pipeline_mode = #tpu.pipeline_mode<synchronous>, transform_indices = @transform_3, window_bounds = array<i64: 32, 32>}, {pipeline_mode = #tpu.pipeline_mode<synchronous>, transform_indices = @transform_4, window_bounds = array<i64: 32, 1>}, {pipeline_mode = #tpu.pipeline_mode<synchronous>, transform_indices = @transform_5, window_bounds = array<i64: 32, 32>}, {pipeline_mode = #tpu.pipeline_mode<synchronous>, transform_indices = @transform_6, window_bounds = array<i64: 32, 1>}, {pipeline_mode = #tpu.pipeline_mode<synchronous>, transform_indices = @transform_7, window_bounds = array<i64: 32, 32>}, {pipeline_mode = #tpu.pipeline_mode<synchronous>, transform_indices = @transform_8, window_bounds = array<i64: 32, 1>}, {transform_indices = @transform_9, window_bounds = array<i64: 1, 8, 32>}, {transform_indices = @transform_10, window_bounds = array<i64: 1, 4, 8, 8>}]} {
    %c0 = arith.constant 0 : index
    %c0_0 = arith.constant 0 : index
    %c0_1 = arith.constant 0 : index
    %0 = vector.load %arg2[%c0, %c0_0, %c0_1] : memref<1x8x32xf32, #tpu.memory_space<vmem>>, vector<1x8x32xf32>
    %1 = vector.shape_cast %0 : vector<1x8x32xf32> to vector<8x32xf32>
    %c0_2 = arith.constant 0 : index
    %c0_3 = arith.constant 0 : index
    %c0_4 = arith.constant 0 : index
    %2 = vector.load %arg3[%c0_2, %c0_3, %c0_4] : memref<1x8x32xf32, #tpu.memory_space<vmem>>, vector<1x8x32xf32>
    %3 = vector.shape_cast %2 : vector<1x8x32xf32> to vector<8x32xf32>
    %c0_5 = arith.constant 0 : index
    %c0_6 = arith.constant 0 : index
    %c0_7 = arith.constant 0 : index
    %4 = vector.load %arg4[%c0_5, %c0_6, %c0_7] : memref<1x8x32xf32, #tpu.memory_space<vmem>>, vector<1x8x32xf32>
    %5 = vector.shape_cast %4 : vector<1x8x32xf32> to vector<8x32xf32>
    %c0_8 = arith.constant 0 : index
    %c0_9 = arith.constant 0 : index
    %6 = vector.load %arg5[%c0_8, %c0_9] : memref<32x32xf32, #tpu.memory_space<vmem>>, vector<32x32xf32>
    %c0_10 = arith.constant 0 : index
    %c0_11 = arith.constant 0 : index
    %7 = vector.load %arg6[%c0_10, %c0_11] : memref<32x1xf32, #tpu.memory_space<vmem>>, vector<32x1xf32>
    %c0_12 = arith.constant 0 : index
    %c0_13 = arith.constant 0 : index
    %8 = vector.load %arg7[%c0_12, %c0_13] : memref<32x32xf32, #tpu.memory_space<vmem>>, vector<32x32xf32>
    %c0_14 = arith.constant 0 : index
    %c0_15 = arith.constant 0 : index
    %9 = vector.load %arg8[%c0_14, %c0_15] : memref<32x1xf32, #tpu.memory_space<vmem>>, vector<32x1xf32>
    %c0_16 = arith.constant 0 : index
    %c0_17 = arith.constant 0 : index
    %10 = vector.load %arg9[%c0_16, %c0_17] : memref<32x32xf32, #tpu.memory_space<vmem>>, vector<32x32xf32>
    %c0_18 = arith.constant 0 : index
    %c0_19 = arith.constant 0 : index
    %11 = vector.load %arg10[%c0_18, %c0_19] : memref<32x1xf32, #tpu.memory_space<vmem>>, vector<32x1xf32>
    %cst = arith.constant dense<0.000000e+00> : vector<32x8xf32>
    %12 = tpu.matmul %6, %1, %cst {dimension_numbers = #tpu.dot_dimension_numbers<[1], [1], [0], [0], [0, 0, 1, 0], [], []>} : vector<32x32xf32>, vector<8x32xf32>, vector<32x8xf32> -> vector<32x8xf32>
    %13 = vector.broadcast %7 : vector<32x1xf32> to vector<32x8xf32>
    %14 = arith.addf %12, %13 : vector<32x8xf32>
    %15 = vector.shape_cast %14 : vector<32x8xf32> to vector<4x8x8xf32>
    %cst_20 = arith.constant dense<0.000000e+00> : vector<32x8xf32>
    %16 = tpu.matmul %8, %3, %cst_20 {dimension_numbers = #tpu.dot_dimension_numbers<[1], [1], [0], [0], [0, 0, 1, 0], [], []>} : vector<32x32xf32>, vector<8x32xf32>, vector<32x8xf32> -> vector<32x8xf32>
    %17 = vector.broadcast %9 : vector<32x1xf32> to vector<32x8xf32>
    %18 = arith.addf %16, %17 : vector<32x8xf32>
    %19 = vector.shape_cast %18 : vector<32x8xf32> to vector<4x8x8xf32>
    %cst_21 = arith.constant dense<0.000000e+00> : vector<32x8xf32>
    %20 = tpu.matmul %10, %5, %cst_21 {dimension_numbers = #tpu.dot_dimension_numbers<[1], [1], [0], [0], [0, 0, 1, 0], [], []>} : vector<32x32xf32>, vector<8x32xf32>, vector<32x8xf32> -> vector<32x8xf32>
    %21 = vector.broadcast %11 : vector<32x1xf32> to vector<32x8xf32>
    %22 = arith.addf %20, %21 : vector<32x8xf32>
    %23 = vector.shape_cast %22 : vector<32x8xf32> to vector<4x8x8xf32>
    %cst_22 = arith.constant dense<0.000000e+00> : vector<4x8x8xf32>
    %24 = tpu.matmul %15, %19, %cst_22 {dimension_numbers = #tpu.dot_dimension_numbers<[1], [1], [2], [2], [0, 0, 0, 2, 1, 2], [0], [0]>} : vector<4x8x8xf32>, vector<4x8x8xf32>, vector<4x8x8xf32> -> vector<4x8x8xf32>
    %cst_23 = arith.constant dense<0xFF800000> : vector<4x8xf32>
    %25 = vector.multi_reduction <maximumf>, %24, %cst_23 [2] : vector<4x8x8xf32> to vector<4x8xf32>
    %26 = vector.shape_cast %25 : vector<4x8xf32> to vector<4x8x1xf32>
    %27 = vector.broadcast %26 : vector<4x8x1xf32> to vector<4x8x8xf32>
    %28 = arith.subf %24, %27 : vector<4x8x8xf32>
    %29 = math.exp %28 : vector<4x8x8xf32>
    %cst_24 = arith.constant dense<0.000000e+00> : vector<4x8xf32>
    %30 = vector.multi_reduction <add>, %29, %cst_24 [2] : vector<4x8x8xf32> to vector<4x8xf32>
    %31 = vector.shape_cast %30 : vector<4x8xf32> to vector<4x8x1xf32>
    %32 = tpu.reciprocal %31 : vector<4x8x1xf32> -> vector<4x8x1xf32>
    %33 = vector.broadcast %32 : vector<4x8x1xf32> to vector<4x8x8xf32>
    %34 = arith.mulf %29, %33 : vector<4x8x8xf32>
    %cst_25 = arith.constant dense<0.000000e+00> : vector<4x8x8xf32>
    %35 = tpu.matmul %34, %23, %cst_25 {dimension_numbers = #tpu.dot_dimension_numbers<[2], [2], [1], [1], [0, 0, 0, 1, 1, 1], [0], [0]>} : vector<4x8x8xf32>, vector<4x8x8xf32>, vector<4x8x8xf32> -> vector<4x8x8xf32>
    %36 = vector.extract_strided_slice %35 {offsets = [0, 0, 0], sizes = [1, 8, 8], strides = [1, 1, 1]} : vector<4x8x8xf32> to vector<1x8x8xf32>
    %37 = vector.shape_cast %36 : vector<1x8x8xf32> to vector<8x8xf32>
    %38 = vector.extract_strided_slice %35 {offsets = [1, 0, 0], sizes = [1, 8, 8], strides = [1, 1, 1]} : vector<4x8x8xf32> to vector<1x8x8xf32>
    %39 = vector.shape_cast %38 : vector<1x8x8xf32> to vector<8x8xf32>
    %40 = vector.extract_strided_slice %35 {offsets = [2, 0, 0], sizes = [1, 8, 8], strides = [1, 1, 1]} : vector<4x8x8xf32> to vector<1x8x8xf32>
    %41 = vector.shape_cast %40 : vector<1x8x8xf32> to vector<8x8xf32>
    %42 = vector.extract_strided_slice %35 {offsets = [3, 0, 0], sizes = [1, 8, 8], strides = [1, 1, 1]} : vector<4x8x8xf32> to vector<1x8x8xf32>
    %43 = vector.shape_cast %42 : vector<1x8x8xf32> to vector<8x8xf32>
    %44 = tpu.concatenate %37, %39, %41, %43 in 1 : vector<8x8xf32>, vector<8x8xf32>, vector<8x8xf32>, vector<8x8xf32> -> vector<8x32xf32>
    %c0_26 = arith.constant 0 : index
    %c0_27 = arith.constant 0 : index
    %c0_28 = arith.constant 0 : index
    %45 = vector.load %arg11[%c0_26, %c0_27, %c0_28] : memref<1x8x32xf32, #tpu.memory_space<vmem>>, vector<1x8x32xf32>
    %46 = vector.shape_cast %45 : vector<1x8x32xf32> to vector<8x32xf32>
    %47 = vector.shape_cast %44 : vector<8x32xf32> to vector<1x8x32xf32>
    tpu.vector_store %arg11[%c0_26, %c0_27, %c0_28], %47 {strides = array<i32>} : memref<1x8x32xf32, #tpu.memory_space<vmem>>, vector<1x8x32xf32>,
    %c0_29 = arith.constant 0 : index
    %c0_30 = arith.constant 0 : index
    %c0_31 = arith.constant 0 : index
    %c0_32 = arith.constant 0 : index
    %48 = vector.load %arg12[%c0_29, %c0_30, %c0_31, %c0_32] : memref<1x4x8x8xf32, #tpu.memory_space<vmem>>, vector<1x4x8x8xf32>
    %49 = vector.shape_cast %48 : vector<1x4x8x8xf32> to vector<4x8x8xf32>
    %50 = vector.shape_cast %34 : vector<4x8x8xf32> to vector<1x4x8x8xf32>
    tpu.vector_store %arg12[%c0_29, %c0_30, %c0_31, %c0_32], %50 {strides = array<i32>} : memref<1x4x8x8xf32, #tpu.memory_space<vmem>>, vector<1x4x8x8xf32>,
    return
  }
  func.func @transform_0(%arg0: i32, %arg1: i32) -> (i32, i32, i32) {
    %c0_i32 = arith.constant 0 : i32
    %c0_i32_0 = arith.constant 0 : i32
    return %arg0, %arg1, %c0_i32 : i32, i32, i32
  }
  func.func @transform_1(%arg0: i32, %arg1: i32) -> (i32, i32, i32) {
    %c0_i32 = arith.constant 0 : i32
    %c0_i32_0 = arith.constant 0 : i32
    %c0_i32_1 = arith.constant 0 : i32
    return %arg0, %c0_i32, %c0_i32_0 : i32, i32, i32
  }
  func.func @transform_2(%arg0: i32, %arg1: i32) -> (i32, i32, i32) {
    %c0_i32 = arith.constant 0 : i32
    %c0_i32_0 = arith.constant 0 : i32
    %c0_i32_1 = arith.constant 0 : i32
    return %arg0, %c0_i32, %c0_i32_0 : i32, i32, i32
  }
  func.func @transform_3(%arg0: i32, %arg1: i32) -> (i32, i32) {
    %c0_i32 = arith.constant 0 : i32
    %c0_i32_0 = arith.constant 0 : i32
    %c0_i32_1 = arith.constant 0 : i32
    return %c0_i32, %c0_i32_0 : i32, i32
  }
  func.func @transform_4(%arg0: i32, %arg1: i32) -> (i32, i32) {
    %c0_i32 = arith.constant 0 : i32
    %c0_i32_0 = arith.constant 0 : i32
    %c0_i32_1 = arith.constant 0 : i32
    return %c0_i32, %c0_i32_0 : i32, i32
  }
  func.func @transform_5(%arg0: i32, %arg1: i32) -> (i32, i32) {
    %c0_i32 = arith.constant 0 : i32
    %c0_i32_0 = arith.constant 0 : i32
    %c0_i32_1 = arith.constant 0 : i32
    return %c0_i32, %c0_i32_0 : i32, i32
  }
  func.func @transform_6(%arg0: i32, %arg1: i32) -> (i32, i32) {
    %c0_i32 = arith.constant 0 : i32
    %c0_i32_0 = arith.constant 0 : i32
    %c0_i32_1 = arith.constant 0 : i32
    return %c0_i32, %c0_i32_0 : i32, i32
  }
  func.func @transform_7(%arg0: i32, %arg1: i32) -> (i32, i32) {
    %c0_i32 = arith.constant 0 : i32
    %c0_i32_0 = arith.constant 0 : i32
    %c0_i32_1 = arith.constant 0 : i32
    return %c0_i32, %c0_i32_0 : i32, i32
  }
  func.func @transform_8(%arg0: i32, %arg1: i32) -> (i32, i32) {
    %c0_i32 = arith.constant 0 : i32
    %c0_i32_0 = arith.constant 0 : i32
    %c0_i32_1 = arith.constant 0 : i32
    return %c0_i32, %c0_i32_0 : i32, i32
  }
  func.func @transform_9(%arg0: i32, %arg1: i32) -> (i32, i32, i32) {
    %c0_i32 = arith.constant 0 : i32
    %c0_i32_0 = arith.constant 0 : i32
    return %arg0, %arg1, %c0_i32 : i32, i32, i32
  }
  func.func @transform_10(%arg0: i32, %arg1: i32) -> (i32, i32, i32, i32) {
    %c0_i32 = arith.constant 0 : i32
    %c0_i32_0 = arith.constant 0 : i32
    %c0_i32_1 = arith.constant 0 : i32
    return %arg0, %c0_i32, %arg1, %c0_i32_0 : i32, i32, i32, i32
  }
}

</mosaic_0001>

<llo_original>
// kernel: tpu_custom_call.1
$region0: #{tpu_custom_call.1}
  #allocation0 [shape = 'u32[]', space=smem, size = 0x4, offset = 0x4, fixed_abs, tag = 'smem constant byte address 0x4 - core index']
  #allocation1 [shape = 'u32[144,128]{1,0:T(1,128)}', space=vmem, size = 0x12000, scoped, tag = 'internal scratch']
  %s0 = inlined_call_operand.hbm [shape: f32[2,8,32], index: 0, kind: input, shape index: {}]
  %s1 = inlined_call_operand.hbm [shape: f32[2,8,32], index: 1, kind: input, shape index: {}]
  %s2 = inlined_call_operand.hbm [shape: f32[2,8,32], index: 2, kind: input, shape index: {}]
  %s3 = inlined_call_operand.vmem [shape: f32[32,32], index: 3, kind: input, shape index: {}]
  %s4 = inlined_call_operand.vmem [shape: f32[32,1], index: 4, kind: input, shape index: {}]
  %s5 = inlined_call_operand.vmem [shape: f32[32,32], index: 5, kind: input, shape index: {}]
  %s6 = inlined_call_operand.vmem [shape: f32[32,1], index: 6, kind: input, shape index: {}]
  %s7 = inlined_call_operand.vmem [shape: f32[32,32], index: 7, kind: input, shape index: {}]
  %s8 = inlined_call_operand.vmem [shape: f32[32,1], index: 8, kind: input, shape index: {}]
  %s9 = inlined_call_operand.hbm [shape: f32[2,8,32], index: 9, kind: output, shape index: {0}]
  %s10 = inlined_call_operand.hbm [shape: f32[2,4,8,8], index: 10, kind: output, shape index: {1}]
  %11 = xla_tuple %s9, %s10
  %s12 = sld [smem:[#allocation0]]
  $region89: #{tpu_custom_call.1} parent=0
    _
  %s14 = ssub.s32 1, %s12
  %s15 = scalar_select 0, %s14, %s12
  $region1: #{tpu_custom_call.1} parent=0
    #allocation2 [shape = 'u8[8192]{0}', space=vmem, size = 0x2000, scoped, tag = 'input window, operand 0']
    #allocation3 [shape = 's32[2]{0}', space=sflag, size = 0x8, scoped, tag = 'scoped memory for tpu_custom_call.1']
    #allocation4 [shape = 's32[2]{0}', space=sflag, size = 0x8, scoped, tag = 'scoped memory for tpu_custom_call.1']
    #allocation5 [shape = 'u8[8192]{0}', space=vmem, size = 0x2000, scoped, tag = 'input window, operand 1']
    #allocation6 [shape = 's32[2]{0}', space=sflag, size = 0x8, scoped, tag = 'scoped memory for tpu_custom_call.1']
    #allocation7 [shape = 'u8[8192]{0}', space=vmem, size = 0x2000, scoped, tag = 'input window, operand 2']
    #allocation8 [shape = 'u8[8192]{0}', space=vmem, size = 0x2000, scoped, tag = 'output window, operand 0']
    #allocation9 [shape = 'u8[32768]{0}', space=vmem, size = 0x8000, scoped, tag = 'output window, operand 1']
    #allocation10 [shape = 's32[2]{0}', space=sflag, size = 0x8, scoped, tag = 'scoped memory for tpu_custom_call.1']
    %16 = vsyncpa [#allocation3], 0
    %s17 = scalar_lea.sflag [#allocation3], 1
    %18 = vsyncpa %s17, 0
    %19 = vsyncpa [#allocation6], 0
    %s20 = scalar_lea.sflag [#allocation6], 1
    %21 = vsyncpa %s20, 0
    %22 = vsyncpa [#allocation4], 0
    %s23 = scalar_lea.sflag [#allocation4], 1
    %24 = vsyncpa %s23, 0
    %25 = vsyncpa [#allocation10], 0
    %s26 = scalar_lea.sflag [#allocation10], 1
    %27 = vsyncpa %s26, 0
    loop: start=0, step=1, limit=4
    $region2: #{tpu_custom_call.1} parent=1 // loop_pre_header
      _
    $region3: #{tpu_custom_call.1} parent=1 // loop_header
      %s29 = sphi 0, %s33
      %p30 = scmp.ge.s32.totalorder %s29, 4
      %s36 = sphi 0, %s48
      %s37 = sphi 0, %s44
      %s38 = sphi 0, %s36
      %s39 = sphi 0, %s37
      %s40 = sphi 0, %s38
      %s41 = sphi 0, %s39
      %s53 = sphi 0, %s55
      %s56 = sphi 0, %s53
      %s57 = sphi 0, %s56
      %s73 = sphi 0, %s57
      %s79 = sphi 0, %s81
      %s82 = sphi 0, %s79
      %s83 = sphi 0, %s82
      %s99 = sphi 0, %s83
      %s105 = sphi 0, %s107
      %s108 = sphi 0, %s105
      %s109 = sphi 0, %s108
      %s125 = sphi 0, %s109
      %s129 = sphi 0, %s129
      %s131 = sphi 0, %s129
      %s132 = sphi 0, %s131
      %s146 = sphi 0, %s132
      %s150 = sphi 0, %s150
      %s152 = sphi 0, %s150
      %s153 = sphi 0, %s152
      %s167 = sphi 0, %s153
      %s171 = sphi 0, %s171
      %s173 = sphi 0, %s171
      %s174 = sphi 0, %s173
      %s188 = sphi 0, %s174
      %s192 = sphi 0, %s192
      %s194 = sphi 0, %s192
      %s195 = sphi 0, %s194
      %s209 = sphi 0, %s195
      %s213 = sphi 0, %s213
      %s215 = sphi 0, %s213
      %s216 = sphi 0, %s215
      %s230 = sphi 0, %s216
      %s234 = sphi 0, %s234
      %s236 = sphi 0, %s234
      %s237 = sphi 0, %s236
      %s251 = sphi 0, %s237
      %s259 = sphi 0, %s261
      %s262 = sphi 0, %s259
      %s263 = sphi 0, %s262
      %s279 = sphi 0, %s263
      %s287 = sphi 0, %s289
      %s290 = sphi 0, %s287
      %s291 = sphi 0, %s290
      %s307 = sphi 0, %s291
    $region4: #{tpu_custom_call.1} parent=1 // loop_header_branch
      %32 = sbr.rel (%p30) target = $region8
    $region5: #{tpu_custom_call.1} parent=1 // loop_body
      %s34 = ssub.s32 %s29, 1
      %s35 = ssub.s32 %s29, 2
      %s42 = sadd.s32 1, %s37
      %p43 = scmp.ge.s32.totalorder %s42, 1
      %s44 = scalar_select %p43, 0, %s42
      %s45 = sadd.s32 1, %s36
      %s46 = scalar_select %p43, %s45, %s36
      %p47 = scmp.ge.s32.totalorder %s46, 2
      %s48 = scalar_select %p47, 0, %s46
      %s49 = ssub.s32 %s36, %s48
      %s50 = ssub.s32 %s37, %s44
      %s51 = sor.u32 %s49, %s50
      %p52 = scmp.eq.s32.totalorder %s51, 0
      %s54 = sadd.s32 %s53, 1
      %s55 = scalar_select %p52, %s53, %s54
      %p58 = pneg %p52
      %p59 = scmp.eq.s32.totalorder %s29, 1
      %p60 = por %p58, %p59
      %p61 = scmp.ne.s32.totalorder %s53, %s56
      %p62 = scmp.eq.s32.totalorder %s29, 0
      %p63 = por %p61, %p62
      %p64 = scmp.ne.s32.totalorder %s53, %s56
      %p65 = scmp.eq.s32.totalorder %s34, 1
      %p66 = por %p64, %p65
      %p67 = scmp.ne.s32.totalorder %s56, %s57
      %p68 = scmp.eq.s32.totalorder %s34, 0
      %p69 = por %p67, %p68
      %p70 = scmp.ne.s32.totalorder %s56, %s57
      %p71 = scmp.eq.s32.totalorder %s35, 1
      %p72 = por %p70, %p71
      %p74 = scmp.ne.s32.totalorder %s57, %s73
      %p75 = scmp.eq.s32.totalorder %s35, 0
      %p76 = por %p74, %p75
      %s77 = ssub.s32 %s36, %s48
      %p78 = scmp.eq.s32.totalorder %s77, 0
      %s80 = sadd.s32 %s79, 1
      %s81 = scalar_select %p78, %s79, %s80
      %p84 = pneg %p78
      %p85 = scmp.eq.s32.totalorder %s29, 1
      %p86 = por %p84, %p85
      %p87 = scmp.ne.s32.totalorder %s79, %s82
      %p88 = scmp.eq.s32.totalorder %s29, 0
      %p89 = por %p87, %p88
      %p90 = scmp.ne.s32.totalorder %s79, %s82
      %p91 = scmp.eq.s32.totalorder %s34, 1
      %p92 = por %p90, %p91
      %p93 = scmp.ne.s32.totalorder %s82, %s83
      %p94 = scmp.eq.s32.totalorder %s34, 0
      %p95 = por %p93, %p94
      %p96 = scmp.ne.s32.totalorder %s82, %s83
      %p97 = scmp.eq.s32.totalorder %s35, 1
      %p98 = por %p96, %p97
      %p100 = scmp.ne.s32.totalorder %s83, %s99
      %p101 = scmp.eq.s32.totalorder %s35, 0
      %p102 = por %p100, %p101
      %s103 = ssub.s32 %s36, %s48
      %p104 = scmp.eq.s32.totalorder %s103, 0
      %s106 = sadd.s32 %s105, 1
      %s107 = scalar_select %p104, %s105, %s106
      %p110 = pneg %p104
      %p111 = scmp.eq.s32.totalorder %s29, 1
      %p112 = por %p110, %p111
      %p113 = scmp.ne.s32.totalorder %s105, %s108
      %p114 = scmp.eq.s32.totalorder %s29, 0
      %p115 = por %p113, %p114
      %p116 = scmp.ne.s32.totalorder %s105, %s108
      %p117 = scmp.eq.s32.totalorder %s34, 1
      %p118 = por %p116, %p117
      %p119 = scmp.ne.s32.totalorder %s108, %s109
      %p120 = scmp.eq.s32.totalorder %s34, 0
      %p121 = por %p119, %p120
      %p122 = scmp.ne.s32.totalorder %s108, %s109
      %p123 = scmp.eq.s32.totalorder %s35, 1
      %p124 = por %p122, %p123
      %p126 = scmp.ne.s32.totalorder %s109, %s125
      %p127 = scmp.eq.s32.totalorder %s35, 0
      %p128 = por %p126, %p127
      %s130 = sadd.s32 %s129, 1
      %p133 = scmp.eq.s32.totalorder %s29, 1
      %p134 = scmp.ne.s32.totalorder %s129, %s131
      %p135 = scmp.eq.s32.totalorder %s29, 0
      %p136 = por %p134, %p135
      %p137 = scmp.ne.s32.totalorder %s129, %s131
      %p138 = scmp.eq.s32.totalorder %s34, 1
      %p139 = por %p137, %p138
      %p140 = scmp.ne.s32.totalorder %s131, %s132
      %p141 = scmp.eq.s32.totalorder %s34, 0
      %p142 = por %p140, %p141
      %p143 = scmp.ne.s32.totalorder %s131, %s132
      %p144 = scmp.eq.s32.totalorder %s35, 1
      %p145 = por %p143, %p144
      %p147 = scmp.ne.s32.totalorder %s132, %s146
      %p148 = scmp.eq.s32.totalorder %s35, 0
      %p149 = por %p147, %p148
      %s151 = sadd.s32 %s150, 1
      %p154 = scmp.eq.s32.totalorder %s29, 1
      %p155 = scmp.ne.s32.totalorder %s150, %s152
      %p156 = scmp.eq.s32.totalorder %s29, 0
      %p157 = por %p155, %p156
      %p158 = scmp.ne.s32.totalorder %s150, %s152
      %p159 = scmp.eq.s32.totalorder %s34, 1
      %p160 = por %p158, %p159
      %p161 = scmp.ne.s32.totalorder %s152, %s153
      %p162 = scmp.eq.s32.totalorder %s34, 0
      %p163 = por %p161, %p162
      %p164 = scmp.ne.s32.totalorder %s152, %s153
      %p165 = scmp.eq.s32.totalorder %s35, 1
      %p166 = por %p164, %p165
      %p168 = scmp.ne.s32.totalorder %s153, %s167
      %p169 = scmp.eq.s32.totalorder %s35, 0
      %p170 = por %p168, %p169
      %s172 = sadd.s32 %s171, 1
      %p175 = scmp.eq.s32.totalorder %s29, 1
      %p176 = scmp.ne.s32.totalorder %s171, %s173
      %p177 = scmp.eq.s32.totalorder %s29, 0
      %p178 = por %p176, %p177
      %p179 = scmp.ne.s32.totalorder %s171, %s173
      %p180 = scmp.eq.s32.totalorder %s34, 1
      %p181 = por %p179, %p180
      %p182 = scmp.ne.s32.totalorder %s173, %s174
      %p183 = scmp.eq.s32.totalorder %s34, 0
      %p184 = por %p182, %p183
      %p185 = scmp.ne.s32.totalorder %s173, %s174
      %p186 = scmp.eq.s32.totalorder %s35, 1
      %p187 = por %p185, %p186
      %p189 = scmp.ne.s32.totalorder %s174, %s188
      %p190 = scmp.eq.s32.totalorder %s35, 0
      %p191 = por %p189, %p190
      %s193 = sadd.s32 %s192, 1
      %p196 = scmp.eq.s32.totalorder %s29, 1
      %p197 = scmp.ne.s32.totalorder %s192, %s194
      %p198 = scmp.eq.s32.totalorder %s29, 0
      %p199 = por %p197, %p198
      %p200 = scmp.ne.s32.totalorder %s192, %s194
      %p201 = scmp.eq.s32.totalorder %s34, 1
      %p202 = por %p200, %p201
      %p203 = scmp.ne.s32.totalorder %s194, %s195
      %p204 = scmp.eq.s32.totalorder %s34, 0
      %p205 = por %p203, %p204
      %p206 = scmp.ne.s32.totalorder %s194, %s195
      %p207 = scmp.eq.s32.totalorder %s35, 1
      %p208 = por %p206, %p207
      %p210 = scmp.ne.s32.totalorder %s195, %s209
      %p211 = scmp.eq.s32.totalorder %s35, 0
      %p212 = por %p210, %p211
      %s214 = sadd.s32 %s213, 1
      %p217 = scmp.eq.s32.totalorder %s29, 1
      %p218 = scmp.ne.s32.totalorder %s213, %s215
      %p219 = scmp.eq.s32.totalorder %s29, 0
      %p220 = por %p218, %p219
      %p221 = scmp.ne.s32.totalorder %s213, %s215
      %p222 = scmp.eq.s32.totalorder %s34, 1
      %p223 = por %p221, %p222
      %p224 = scmp.ne.s32.totalorder %s215, %s216
      %p225 = scmp.eq.s32.totalorder %s34, 0
      %p226 = por %p224, %p225
      %p227 = scmp.ne.s32.totalorder %s215, %s216
      %p228 = scmp.eq.s32.totalorder %s35, 1
      %p229 = por %p227, %p228
      %p231 = scmp.ne.s32.totalorder %s216, %s230
      %p232 = scmp.eq.s32.totalorder %s35, 0
      %p233 = por %p231, %p232
      %s235 = sadd.s32 %s234, 1
      %p238 = scmp.eq.s32.totalorder %s29, 1
      %p239 = scmp.ne.s32.totalorder %s234, %s236
      %p240 = scmp.eq.s32.totalorder %s29, 0
      %p241 = por %p239, %p240
      %p242 = scmp.ne.s32.totalorder %s234, %s236
      %p243 = scmp.eq.s32.totalorder %s34, 1
      %p244 = por %p242, %p243
      %p245 = scmp.ne.s32.totalorder %s236, %s237
      %p246 = scmp.eq.s32.totalorder %s34, 0
      %p247 = por %p245, %p246
      %p248 = scmp.ne.s32.totalorder %s236, %s237
      %p249 = scmp.eq.s32.totalorder %s35, 1
      %p250 = por %p248, %p249
      %p252 = scmp.ne.s32.totalorder %s237, %s251
      %p253 = scmp.eq.s32.totalorder %s35, 0
      %p254 = por %p252, %p253
      %s255 = ssub.s32 %s36, %s48
      %s256 = ssub.s32 %s37, %s44
      %s257 = sor.u32 %s255, %s256
      %p258 = scmp.eq.s32.totalorder %s257, 0
      %s260 = sadd.s32 %s259, 1
      %s261 = scalar_select %p258, %s259, %s260
      %p264 = pneg %p258
      %p265 = scmp.eq.s32.totalorder %s29, 1
      %p266 = por %p264, %p265
      %p267 = scmp.ne.s32.totalorder %s259, %s262
      %p268 = scmp.eq.s32.totalorder %s29, 0
      %p269 = por %p267, %p268
      %p270 = scmp.ne.s32.totalorder %s259, %s262
      %p271 = scmp.eq.s32.totalorder %s34, 1
      %p272 = por %p270, %p271
      %p273 = scmp.ne.s32.totalorder %s262, %s263
      %p274 = scmp.eq.s32.totalorder %s34, 0
      %p275 = por %p273, %p274
      %p276 = scmp.ne.s32.totalorder %s262, %s263
      %p277 = scmp.eq.s32.totalorder %s35, 1
      %p278 = por %p276, %p277
      %p280 = scmp.ne.s32.totalorder %s263, %s279
      %p281 = scmp.eq.s32.totalorder %s35, 0
      %p282 = por %p280, %p281
      %s283 = ssub.s32 %s36, %s48
      %s284 = ssub.s32 %s37, %s44
      %s285 = sor.u32 %s283, %s284
      %p286 = scmp.eq.s32.totalorder %s285, 0
      %s288 = sadd.s32 %s287, 1
      %s289 = scalar_select %p286, %s287, %s288
      %p292 = pneg %p286
      %p293 = scmp.eq.s32.totalorder %s29, 1
      %p294 = por %p292, %p293
      %p295 = scmp.ne.s32.totalorder %s287, %s290
      %p296 = scmp.eq.s32.totalorder %s29, 0
      %p297 = por %p295, %p296
      %p298 = scmp.ne.s32.totalorder %s287, %s290
      %p299 = scmp.eq.s32.totalorder %s34, 1
      %p300 = por %p298, %p299
      %p301 = scmp.ne.s32.totalorder %s290, %s291
      %p302 = scmp.eq.s32.totalorder %s34, 0
      %p303 = por %p301, %p302
      %p304 = scmp.ne.s32.totalorder %s290, %s291
      %p305 = scmp.eq.s32.totalorder %s35, 1
      %p306 = por %p304, %p305
      %p308 = scmp.ne.s32.totalorder %s291, %s307
      %p309 = scmp.eq.s32.totalorder %s35, 0
      %p310 = por %p308, %p309
      %p311 = scmp.le.s32.totalorder 1, %s29
      %p312 = scmp.lt.s32.totalorder %s29, 3
      %p313 = pnand %p311, %p312
      %p314 = pneg %p313
      // Predicated region
      $region9: #{tpu_custom_call.1} parent=5 // pred_check
        _
      $region10: #{tpu_custom_call.1} parent=5 // pred_check_branch
        %316 = sbr.rel (%p313) target = $region12
      $region11: #{tpu_custom_call.1} parent=5 // pred_region
        %s317 = ssub.s32 %s29, 1
        // Predicated region
        $region13: #{tpu_custom_call.1} parent=11 // pred_check
          %p318 = pneg %p142
        $region14: #{tpu_custom_call.1} parent=11 // pred_check_branch
          %320 = sbr.rel (%p318) target = $region16
        $region15: #{tpu_custom_call.1} parent=11 // pred_region
          _
        $region16: #{tpu_custom_call.1} parent=11 // pred_fallthru
          _
        // Predicated region
        $region17: #{tpu_custom_call.1} parent=11 // pred_check
          %p321 = pneg %p163
        $region18: #{tpu_custom_call.1} parent=11 // pred_check_branch
          %323 = sbr.rel (%p321) target = $region20
        $region19: #{tpu_custom_call.1} parent=11 // pred_region
          _
        $region20: #{tpu_custom_call.1} parent=11 // pred_fallthru
          _
        // Predicated region
        $region21: #{tpu_custom_call.1} parent=11 // pred_check
          %p324 = pneg %p184
        $region22: #{tpu_custom_call.1} parent=11 // pred_check_branch
          %326 = sbr.rel (%p324) target = $region24
        $region23: #{tpu_custom_call.1} parent=11 // pred_region
          _
        $region24: #{tpu_custom_call.1} parent=11 // pred_fallthru
          _
        // Predicated region
        $region25: #{tpu_custom_call.1} parent=11 // pred_check
          %p327 = pneg %p205
        $region26: #{tpu_custom_call.1} parent=11 // pred_check_branch
          %329 = sbr.rel (%p327) target = $region28
        $region27: #{tpu_custom_call.1} parent=11 // pred_region
          _
        $region28: #{tpu_custom_call.1} parent=11 // pred_fallthru
          _
        // Predicated region
        $region29: #{tpu_custom_call.1} parent=11 // pred_check
          %p330 = pneg %p226
        $region30: #{tpu_custom_call.1} parent=11 // pred_check_branch
          %332 = sbr.rel (%p330) target = $region32
        $region31: #{tpu_custom_call.1} parent=11 // pred_region
          _
        $region32: #{tpu_custom_call.1} parent=11 // pred_fallthru
          _
        // Predicated region
        $region33: #{tpu_custom_call.1} parent=11 // pred_check
          %p333 = pneg %p247
        $region34: #{tpu_custom_call.1} parent=11 // pred_check_branch
          %335 = sbr.rel (%p333) target = $region36
        $region35: #{tpu_custom_call.1} parent=11 // pred_region
          _
        $region36: #{tpu_custom_call.1} parent=11 // pred_fallthru
          _
      $region12: #{tpu_custom_call.1} parent=5 // pred_fallthru
        _
      %p336 = scmp.lt.s32.totalorder %s29, 2
      // Predicated region
      $region37: #{tpu_custom_call.1} parent=5 // pred_check
        %p337 = pneg %p336
      $region38: #{tpu_custom_call.1} parent=5 // pred_check_branch
        %339 = sbr.rel (%p337) target = $region40
      $region39: #{tpu_custom_call.1} parent=5 // pred_region
        // Predicated region
        $region41: #{tpu_custom_call.1} parent=39 // pred_check
          %p340 = pneg %p63
        $region42: #{tpu_custom_call.1} parent=39 // pred_check_branch
          %342 = sbr.rel (%p340) target = $region44
        $region43: #{tpu_custom_call.1} parent=39 // pred_region
          %s343 = sand.u32 %s53, 1
          %s344 = scalar_lea.sflag [#allocation3], %s343
          %s345 = sand.u32 %s53, 1
          %s346 = smul.addr %s345, 8
          %s347 = scalar_lea.vmem [#allocation2], %s346
          %s349 = ssub.s32 128, 128
          %350 = vsyncadd %s344, %s349
          %s351 = sadd.s32 %s37, %s36
          %s352 = smul.addr %s351, 128
          %s353 = scalar_lea.hbm %s0, %s352
          %s355 = sshll.u32 %s347, 4
          %s356 = int_to_ptr.vmem [resolvable:$true] %s355
          %358 = dma.hbm_to_vmem [thread:$0]  %s353, 128, %s356, %s344
        $region44: #{tpu_custom_call.1} parent=39 // pred_fallthru
          _
        // Predicated region
        $region45: #{tpu_custom_call.1} parent=39 // pred_check
          %p359 = pneg %p89
        $region46: #{tpu_custom_call.1} parent=39 // pred_check_branch
          %361 = sbr.rel (%p359) target = $region48
        $region47: #{tpu_custom_call.1} parent=39 // pred_region
          %s362 = sand.u32 %s29, 1
          %s363 = scalar_lea.sflag [#allocation6], %s362
          %s364 = sand.u32 %s79, 1
          %s365 = smul.addr %s364, 8
          %s366 = scalar_lea.vmem [#allocation5], %s365
          %s368 = ssub.s32 128, 128
          %369 = vsyncadd %s363, %s368
          %s370 = smul.addr %s36, 128
          %s371 = scalar_lea.hbm %s1, %s370
          %s373 = sshll.u32 %s366, 4
          %s374 = int_to_ptr.vmem [resolvable:$true] %s373
          %376 = dma.hbm_to_vmem [thread:$0]  %s371, 128, %s374, %s363
        $region48: #{tpu_custom_call.1} parent=39 // pred_fallthru
          _
        // Predicated region
        $region49: #{tpu_custom_call.1} parent=39 // pred_check
          %p377 = pneg %p115
        $region50: #{tpu_custom_call.1} parent=39 // pred_check_branch
          %379 = sbr.rel (%p377) target = $region52
        $region51: #{tpu_custom_call.1} parent=39 // pred_region
          %s380 = sand.u32 %s29, 1
          %s381 = scalar_lea.sflag [#allocation6], %s380
          %s382 = sand.u32 %s105, 1
          %s383 = smul.addr %s382, 8
          %s384 = scalar_lea.vmem [#allocation7], %s383
          %s386 = ssub.s32 128, 128
          %387 = vsyncadd %s381, %s386
          %s388 = smul.addr %s36, 128
          %s389 = scalar_lea.hbm %s2, %s388
          %s391 = sshll.u32 %s384, 4
          %s392 = int_to_ptr.vmem [resolvable:$true] %s391
          %394 = dma.hbm_to_vmem [thread:$0]  %s389, 128, %s392, %s381
        $region52: #{tpu_custom_call.1} parent=39 // pred_fallthru
          _
      $region40: #{tpu_custom_call.1} parent=5 // pred_fallthru
        _
      %p395 = scmp.le.s32.totalorder 1, %s29
      %p396 = scmp.lt.s32.totalorder %s29, 3
      %p397 = pnand %p395, %p396
      %p398 = pneg %p397
      // Predicated region
      $region53: #{tpu_custom_call.1} parent=5 // pred_check
        _
      $region54: #{tpu_custom_call.1} parent=5 // pred_check_branch
        %400 = sbr.rel (%p397) target = $region56
      $region55: #{tpu_custom_call.1} parent=5 // pred_region
        %s401 = ssub.s32 %s29, 1
        %s402 = sand.u32 %s56, 1
        %s403 = scalar_lea.sflag [#allocation3], %s402
        %s404 = sand.u32 %s56, 1
        %s405 = smul.addr %s404, 8
        %s406 = scalar_lea.vmem [#allocation2], %s405
        // Predicated region
        $region57: #{tpu_custom_call.1} parent=55 // pred_check
          %p407 = pneg %p69
        $region58: #{tpu_custom_call.1} parent=55 // pred_check_branch
          %409 = sbr.rel (%p407) target = $region60
        $region59: #{tpu_custom_call.1} parent=55 // pred_region
          %410 = dma.done %s403, 128
        $region60: #{tpu_custom_call.1} parent=55 // pred_fallthru
          _
        %s411 = sand.u32 %s34, 1
        %s412 = scalar_lea.sflag [#allocation6], %s411
        %s413 = sand.u32 %s82, 1
        %s414 = smul.addr %s413, 8
        %s415 = scalar_lea.vmem [#allocation5], %s414
        // Predicated region
        $region61: #{tpu_custom_call.1} parent=55 // pred_check
          %p416 = pneg %p95
        $region62: #{tpu_custom_call.1} parent=55 // pred_check_branch
          %418 = sbr.rel (%p416) target = $region64
        $region63: #{tpu_custom_call.1} parent=55 // pred_region
          %419 = dma.done %s412, 128
        $region64: #{tpu_custom_call.1} parent=55 // pred_fallthru
          _
        %s420 = sand.u32 %s34, 1
        %s421 = scalar_lea.sflag [#allocation6], %s420
        %s422 = sand.u32 %s108, 1
        %s423 = smul.addr %s422, 8
        %s424 = scalar_lea.vmem [#allocation7], %s423
        // Predicated region
        $region65: #{tpu_custom_call.1} parent=55 // pred_check
          %p425 = pneg %p121
        $region66: #{tpu_custom_call.1} parent=55 // pred_check_branch
          %427 = sbr.rel (%p425) target = $region68
        $region67: #{tpu_custom_call.1} parent=55 // pred_region
          %428 = dma.done %s421, 128
        $region68: #{tpu_custom_call.1} parent=55 // pred_fallthru
          _
        %s429 = sand.u32 %s56, 1
        %s430 = scalar_lea.sflag [#allocation3], %s429
        %s431 = sand.u32 %s56, 1
        %s432 = smul.addr %s431, 8
        %s433 = scalar_lea.vmem [#allocation2], %s432
        %p434 = pneg %p69
        %p435 = pneg %p66
        %s436 = sand.u32 %s34, 1
        %s437 = scalar_lea.sflag [#allocation6], %s436
        %s438 = sand.u32 %s82, 1
        %s439 = smul.addr %s438, 8
        %s440 = scalar_lea.vmem [#allocation5], %s439
        %p441 = pneg %p95
        %p442 = pneg %p92
        %s443 = sand.u32 %s34, 1
        %s444 = scalar_lea.sflag [#allocation6], %s443
        %s445 = sand.u32 %s108, 1
        %s446 = smul.addr %s445, 8
        %s447 = scalar_lea.vmem [#allocation7], %s446
        %p448 = pneg %p121
        %p449 = pneg %p118
        %p450 = pneg %p142
        %p451 = pneg %p139
        %p452 = pneg %p163
        %p453 = pneg %p160
        %p454 = pneg %p184
        %p455 = pneg %p181
        %p456 = pneg %p205
        %p457 = pneg %p202
        %p458 = pneg %p226
        %p459 = pneg %p223
        %p460 = pneg %p247
        %p461 = pneg %p244
        %p462 = pneg %p275
        %p463 = pneg %p272
        %s464 = sand.u32 %s262, 1
        %s465 = scalar_lea.sflag [#allocation4], %s464
        %s466 = sand.u32 %s262, 1
        %s467 = smul.addr %s466, 8
        %s468 = scalar_lea.vmem [#allocation8], %s467
        %p469 = pneg %p303
        %p470 = pneg %p300
        %s471 = sand.u32 %s290, 1
        %s472 = scalar_lea.sflag [#allocation10], %s471
        %s473 = sand.u32 %s290, 1
        %s474 = smul.addr %s473, 32
        %s475 = scalar_lea.vmem [#allocation9], %s474
        %v476 = vld [vmem:[%s406] sm:$0xff]
        %v477 = vld [vmem:[%s415] sm:$0xff]
        %v478 = vld [vmem:[%s424] sm:$0xff]
        %v479 = vld [vmem:[%s3] sm:$0xff]
        %v480 = vld [vmem:[%s3 + $0x8] sm:$0xff]
        %v481 = vld [vmem:[%s3 + $0x10] sm:$0xff]
        %v482 = vld [vmem:[%s3 + $0x18] sm:$0xff]
        %v483 = vld [vmem:[%s4] sm:$0xff]
        %v484 = vld [vmem:[%s4 + $0x8] sm:$0xff]
        %v485 = vld [vmem:[%s4 + $0x10] sm:$0xff]
        %v486 = vld [vmem:[%s4 + $0x18] sm:$0xff]
        %v487 = vld [vmem:[%s5] sm:$0xff]
        %v488 = vld [vmem:[%s5 + $0x8] sm:$0xff]
        %v489 = vld [vmem:[%s5 + $0x10] sm:$0xff]
        %v490 = vld [vmem:[%s5 + $0x18] sm:$0xff]
        %v491 = vld [vmem:[%s6] sm:$0xff]
        %v492 = vld [vmem:[%s6 + $0x8] sm:$0xff]
        %v493 = vld [vmem:[%s6 + $0x10] sm:$0xff]
        %v494 = vld [vmem:[%s6 + $0x18] sm:$0xff]
        %v495 = vld [vmem:[%s7] sm:$0xff]
        %v496 = vld [vmem:[%s7 + $0x8] sm:$0xff]
        %v497 = vld [vmem:[%s7 + $0x10] sm:$0xff]
        %v498 = vld [vmem:[%s7 + $0x18] sm:$0xff]
        %v499 = vld [vmem:[%s8] sm:$0xff]
        %v500 = vld [vmem:[%s8 + $0x8] sm:$0xff]
        %v501 = vld [vmem:[%s8 + $0x10] sm:$0xff]
        %v502 = vld [vmem:[%s8 + $0x18] sm:$0xff]
        %504 = vset.pattern.permute.xlu0 0
        %505 = vperm.xlu0 %504, %v483
        %v506 = vpop.permute.xlu0 %505
        %509 = vset.pattern.permute.xlu0 0
        %510 = vperm.xlu0 %509, %v484
        %v511 = vpop.permute.xlu0 %510
        %514 = vset.pattern.permute.xlu0 0
        %515 = vperm.xlu0 %514, %v485
        %v516 = vpop.permute.xlu0 %515
        %519 = vset.pattern.permute.xlu0 0
        %520 = vperm.xlu0 %519, %v486
        %v521 = vpop.permute.xlu0 %520
        %vm523 = vcmask 261120
        %v525 = vsel %vm523, %v479, 0
        %v528 = vsel %vm523, %v480, 0
        %v531 = vsel %vm523, %v481, 0
        %v534 = vsel %vm523, %v482, 0
        %v537 = vsel %vm523, %v476, 0
        %539 = vmatprep.subr.mxu0 0.0
        %540 = vmatpush1.xpose.msra.mxu0 0.0
        %541 = vmatprep.subr.mxu0 0.0
        %542 = vmatpush1.xpose.msra.mxu0 0.0
        %543 = vmatprep.subr.mxu0 0.0
        %544 = vmatpush1.xpose.msra.mxu0 0.0
        %545 = vmatprep.subr.mxu0 0.0
        %546 = vmatpush1.xpose.msra.mxu0 0.0
        %547 = vmatprep.subr.mxu0 0.0
        %548 = vmatpush1.xpose.msra.mxu0 0.0
        %549 = vmatprep.subr.mxu0 0.0
        %550 = vmatpush1.xpose.msra.mxu0 0.0
        %551 = vmatprep.subr.mxu0 0.0
        %552 = vmatpush1.xpose.msra.mxu0 0.0
        %553 = vmatprep.subr.mxu0 0.0
        %554 = vmatpush1.xpose.msra.mxu0 0.0
        %555 = vmatprep.subr.mxu0 0.0
        %556 = vmatpush1.xpose.msra.mxu0 0.0
        %557 = vmatprep.subr.mxu0 0.0
        %558 = vmatpush1.xpose.msra.mxu0 0.0
        %559 = vmatprep.subr.mxu0 0.0
        %560 = vmatpush1.xpose.msra.mxu0 0.0
        %561 = vmatprep.subr.mxu0 0.0
        %562 = vmatpush1.xpose.msra.mxu0 0.0
        %563 = vmatprep.subr.mxu0 0.0
        %564 = vmatpush1.xpose.msra.mxu0 0.0
        %565 = vmatprep.subr.mxu0 0.0
        %566 = vmatpush1.xpose.msra.mxu0 0.0
        %567 = vmatprep.subr.mxu0 0.0
        %568 = vmatpush1.xpose.msra.mxu0 0.0
        %569 = vmatprep.subr.mxu0 0.0
        %570 = vmatpush1.xpose.msra.mxu0 %v537
        %571 = vmatprep.subr.mxu0 0.0
        %572 = vmatpush2.xpose.msra.mxu0 0.0
        %573 = vmatprep.subr.mxu0 0.0
        %574 = vmatpush2.xpose.msra.mxu0 0.0
        %575 = vmatprep.subr.mxu0 0.0
        %576 = vmatpush2.xpose.msra.mxu0 0.0
        %577 = vmatprep.subr.mxu0 0.0
        %578 = vmatpush2.xpose.msra.mxu0 0.0
        %579 = vmatprep.subr.mxu0 0.0
        %580 = vmatpush2.xpose.msra.mxu0 0.0
        %581 = vmatprep.subr.mxu0 0.0
        %582 = vmatpush2.xpose.msra.mxu0 0.0
        %583 = vmatprep.subr.mxu0 0.0
        %584 = vmatpush2.xpose.msra.mxu0 0.0
        %585 = vmatprep.subr.mxu0 0.0
        %586 = vmatpush2.xpose.msra.mxu0 0.0
        %587 = vmatprep.subr.mxu0 0.0
        %588 = vmatpush2.xpose.msra.mxu0 0.0
        %589 = vmatprep.subr.mxu0 0.0
        %590 = vmatpush2.xpose.msra.mxu0 0.0
        %591 = vmatprep.subr.mxu0 0.0
        %592 = vmatpush2.xpose.msra.mxu0 0.0
        %593 = vmatprep.subr.mxu0 0.0
        %594 = vmatpush2.xpose.msra.mxu0 0.0
        %595 = vmatprep.subr.mxu0 0.0
        %596 = vmatpush2.xpose.msra.mxu0 0.0
        %597 = vmatprep.subr.mxu0 0.0
        %598 = vmatpush2.xpose.msra.mxu0 0.0
        %599 = vmatprep.subr.mxu0 0.0
        %600 = vmatpush2.xpose.msra.mxu0 0.0
        %601 = vmatprep.subr.mxu0 0.0
        %602 = vmatpush2.xpose.msra.mxu0 0.0
        %603 = vmatprep.mubr.f32.mxu0 0.0
        %604 = vmatmul.mubr.f32.gmra.mxu0 %v525
        %v605 = vpop.f32.mrf.mxu0
        %v606 = vadd.f32 %v506, %v605
        %v607 = vpop.f32.mrf.mxu0
        %608 = vmatprep.mubr.f32.mxu0 0.0
        %609 = vmatmul.mubr.f32.gmra.mxu0 %v528
        %v610 = vpop.f32.mrf.mxu0
        %v611 = vadd.f32 %v511, %v610
        %v612 = vpop.f32.mrf.mxu0
        %613 = vmatprep.mubr.f32.mxu0 0.0
        %614 = vmatmul.mubr.f32.gmra.mxu0 %v531
        %v615 = vpop.f32.mrf.mxu0
        %v616 = vadd.f32 %v516, %v615
        %v617 = vpop.f32.mrf.mxu0
        %618 = vmatprep.mubr.f32.mxu0 0.0
        %619 = vmatmul.mubr.f32.gmra.mxu0 %v534
        %v620 = vpop.f32.mrf.mxu0
        %v621 = vadd.f32 %v521, %v620
        %v622 = vpop.f32.mrf.mxu0
        %623 = vdwg.mxu0
        %625 = vset.pattern.permute.xlu0 0
        %626 = vperm.xlu0 %625, %v491
        %v627 = vpop.permute.xlu0 %626
        %630 = vset.pattern.permute.xlu0 0
        %631 = vperm.xlu0 %630, %v492
        %v632 = vpop.permute.xlu0 %631
        %635 = vset.pattern.permute.xlu0 0
        %636 = vperm.xlu0 %635, %v493
        %v637 = vpop.permute.xlu0 %636
        %640 = vset.pattern.permute.xlu0 0
        %641 = vperm.xlu0 %640, %v494
        %v642 = vpop.permute.xlu0 %641
        %v645 = vsel %vm523, %v487, 0
        %v648 = vsel %vm523, %v488, 0
        %v651 = vsel %vm523, %v489, 0
        %v654 = vsel %vm523, %v490, 0
        %v657 = vsel %vm523, %v477, 0
        %659 = vmatprep.subr.mxu0 0.0
        %660 = vmatpush1.xpose.msra.mxu0 0.0
        %661 = vmatprep.subr.mxu0 0.0
        %662 = vmatpush1.xpose.msra.mxu0 0.0
        %663 = vmatprep.subr.mxu0 0.0
        %664 = vmatpush1.xpose.msra.mxu0 0.0
        %665 = vmatprep.subr.mxu0 0.0
        %666 = vmatpush1.xpose.msra.mxu0 0.0
        %667 = vmatprep.subr.mxu0 0.0
        %668 = vmatpush1.xpose.msra.mxu0 0.0
        %669 = vmatprep.subr.mxu0 0.0
        %670 = vmatpush1.xpose.msra.mxu0 0.0
        %671 = vmatprep.subr.mxu0 0.0
        %672 = vmatpush1.xpose.msra.mxu0 0.0
        %673 = vmatprep.subr.mxu0 0.0
        %674 = vmatpush1.xpose.msra.mxu0 0.0
        %675 = vmatprep.subr.mxu0 0.0
        %676 = vmatpush1.xpose.msra.mxu0 0.0
        %677 = vmatprep.subr.mxu0 0.0
        %678 = vmatpush1.xpose.msra.mxu0 0.0
        %679 = vmatprep.subr.mxu0 0.0
        %680 = vmatpush1.xpose.msra.mxu0 0.0
        %681 = vmatprep.subr.mxu0 0.0
        %682 = vmatpush1.xpose.msra.mxu0 0.0
        %683 = vmatprep.subr.mxu0 0.0
        %684 = vmatpush1.xpose.msra.mxu0 0.0
        %685 = vmatprep.subr.mxu0 0.0
        %686 = vmatpush1.xpose.msra.mxu0 0.0
        %687 = vmatprep.subr.mxu0 0.0
        %688 = vmatpush1.xpose.msra.mxu0 0.0
        %689 = vmatprep.subr.mxu0 0.0
        %690 = vmatpush1.xpose.msra.mxu0 %v657
        %691 = vmatprep.subr.mxu0 0.0
        %692 = vmatpush2.xpose.msra.mxu0 0.0
        %693 = vmatprep.subr.mxu0 0.0
        %694 = vmatpush2.xpose.msra.mxu0 0.0
        %695 = vmatprep.subr.mxu0 0.0
        %696 = vmatpush2.xpose.msra.mxu0 0.0
        %697 = vmatprep.subr.mxu0 0.0
        %698 = vmatpush2.xpose.msra.mxu0 0.0
        %699 = vmatprep.subr.mxu0 0.0
        %700 = vmatpush2.xpose.msra.mxu0 0.0
        %701 = vmatprep.subr.mxu0 0.0
        %702 = vmatpush2.xpose.msra.mxu0 0.0
        %703 = vmatprep.subr.mxu0 0.0
        %704 = vmatpush2.xpose.msra.mxu0 0.0
        %705 = vmatprep.subr.mxu0 0.0
        %706 = vmatpush2.xpose.msra.mxu0 0.0
        %707 = vmatprep.subr.mxu0 0.0
        %708 = vmatpush2.xpose.msra.mxu0 0.0
        %709 = vmatprep.subr.mxu0 0.0
        %710 = vmatpush2.xpose.msra.mxu0 0.0
        %711 = vmatprep.subr.mxu0 0.0
        %712 = vmatpush2.xpose.msra.mxu0 0.0
        %713 = vmatprep.subr.mxu0 0.0
        %714 = vmatpush2.xpose.msra.mxu0 0.0
        %715 = vmatprep.subr.mxu0 0.0
        %716 = vmatpush2.xpose.msra.mxu0 0.0
        %717 = vmatprep.subr.mxu0 0.0
        %718 = vmatpush2.xpose.msra.mxu0 0.0
        %719 = vmatprep.subr.mxu0 0.0
        %720 = vmatpush2.xpose.msra.mxu0 0.0
        %721 = vmatprep.subr.mxu0 0.0
        %722 = vmatpush2.xpose.msra.mxu0 0.0
        %723 = vmatprep.mubr.f32.mxu0 0.0
        %724 = vmatmul.mubr.f32.gmra.mxu0 %v645
        %v725 = vpop.f32.mrf.mxu0
        %v726 = vadd.f32 %v627, %v725
        %v727 = vpop.f32.mrf.mxu0
        %728 = vmatprep.mubr.f32.mxu0 0.0
        %729 = vmatmul.mubr.f32.gmra.mxu0 %v648
        %v730 = vpop.f32.mrf.mxu0
        %v731 = vadd.f32 %v632, %v730
        %v732 = vpop.f32.mrf.mxu0
        %733 = vmatprep.mubr.f32.mxu0 0.0
        %734 = vmatmul.mubr.f32.gmra.mxu0 %v651
        %v735 = vpop.f32.mrf.mxu0
        %v736 = vadd.f32 %v637, %v735
        %v737 = vpop.f32.mrf.mxu0
        %738 = vmatprep.mubr.f32.mxu0 0.0
        %739 = vmatmul.mubr.f32.gmra.mxu0 %v654
        %v740 = vpop.f32.mrf.mxu0
        %v741 = vadd.f32 %v642, %v740
        %v742 = vpop.f32.mrf.mxu0
        %743 = vdwg.mxu0
        %745 = vset.pattern.permute.xlu0 0
        %746 = vperm.xlu0 %745, %v499
        %v747 = vpop.permute.xlu0 %746
        %750 = vset.pattern.permute.xlu0 0
        %751 = vperm.xlu0 %750, %v500
        %v752 = vpop.permute.xlu0 %751
        %755 = vset.pattern.permute.xlu0 0
        %756 = vperm.xlu0 %755, %v501
        %v757 = vpop.permute.xlu0 %756
        %760 = vset.pattern.permute.xlu0 0
        %761 = vperm.xlu0 %760, %v502
        %v762 = vpop.permute.xlu0 %761
        %v765 = vsel %vm523, %v495, 0
        %v768 = vsel %vm523, %v496, 0
        %v771 = vsel %vm523, %v497, 0
        %v774 = vsel %vm523, %v498, 0
        %v777 = vsel %vm523, %v478, 0
        %779 = vmatprep.subr.mxu0 0.0
        %780 = vmatpush1.xpose.msra.mxu0 0.0
        %781 = vmatprep.subr.mxu0 0.0
        %782 = vmatpush1.xpose.msra.mxu0 0.0
        %783 = vmatprep.subr.mxu0 0.0
        %784 = vmatpush1.xpose.msra.mxu0 0.0
        %785 = vmatprep.subr.mxu0 0.0
        %786 = vmatpush1.xpose.msra.mxu0 0.0
        %787 = vmatprep.subr.mxu0 0.0
        %788 = vmatpush1.xpose.msra.mxu0 0.0
        %789 = vmatprep.subr.mxu0 0.0
        %790 = vmatpush1.xpose.msra.mxu0 0.0
        %791 = vmatprep.subr.mxu0 0.0
        %792 = vmatpush1.xpose.msra.mxu0 0.0
        %793 = vmatprep.subr.mxu0 0.0
        %794 = vmatpush1.xpose.msra.mxu0 0.0
        %795 = vmatprep.subr.mxu0 0.0
        %796 = vmatpush1.xpose.msra.mxu0 0.0
        %797 = vmatprep.subr.mxu0 0.0
        %798 = vmatpush1.xpose.msra.mxu0 0.0
        %799 = vmatprep.subr.mxu0 0.0
        %800 = vmatpush1.xpose.msra.mxu0 0.0
        %801 = vmatprep.subr.mxu0 0.0
        %802 = vmatpush1.xpose.msra.mxu0 0.0
        %803 = vmatprep.subr.mxu0 0.0
        %804 = vmatpush1.xpose.msra.mxu0 0.0
        %805 = vmatprep.subr.mxu0 0.0
        %806 = vmatpush1.xpose.msra.mxu0 0.0
        %807 = vmatprep.subr.mxu0 0.0
        %808 = vmatpush1.xpose.msra.mxu0 0.0
        %809 = vmatprep.subr.mxu0 0.0
        %810 = vmatpush1.xpose.msra.mxu0 %v777
        %811 = vmatprep.subr.mxu0 0.0
        %812 = vmatpush2.xpose.msra.mxu0 0.0
        %813 = vmatprep.subr.mxu0 0.0
        %814 = vmatpush2.xpose.msra.mxu0 0.0
        %815 = vmatprep.subr.mxu0 0.0
        %816 = vmatpush2.xpose.msra.mxu0 0.0
        %817 = vmatprep.subr.mxu0 0.0
        %818 = vmatpush2.xpose.msra.mxu0 0.0
        %819 = vmatprep.subr.mxu0 0.0
        %820 = vmatpush2.xpose.msra.mxu0 0.0
        %821 = vmatprep.subr.mxu0 0.0
        %822 = vmatpush2.xpose.msra.mxu0 0.0
        %823 = vmatprep.subr.mxu0 0.0
        %824 = vmatpush2.xpose.msra.mxu0 0.0
        %825 = vmatprep.subr.mxu0 0.0
        %826 = vmatpush2.xpose.msra.mxu0 0.0
        %827 = vmatprep.subr.mxu0 0.0
        %828 = vmatpush2.xpose.msra.mxu0 0.0
        %829 = vmatprep.subr.mxu0 0.0
        %830 = vmatpush2.xpose.msra.mxu0 0.0
        %831 = vmatprep.subr.mxu0 0.0
        %832 = vmatpush2.xpose.msra.mxu0 0.0
        %833 = vmatprep.subr.mxu0 0.0
        %834 = vmatpush2.xpose.msra.mxu0 0.0
        %835 = vmatprep.subr.mxu0 0.0
        %836 = vmatpush2.xpose.msra.mxu0 0.0
        %837 = vmatprep.subr.mxu0 0.0
        %838 = vmatpush2.xpose.msra.mxu0 0.0
        %839 = vmatprep.subr.mxu0 0.0
        %840 = vmatpush2.xpose.msra.mxu0 0.0
        %841 = vmatprep.subr.mxu0 0.0
        %842 = vmatpush2.xpose.msra.mxu0 0.0
        %843 = vmatprep.mubr.f32.mxu0 0.0
        %844 = vmatmul.mubr.f32.gmra.mxu0 %v765
        %v845 = vpop.f32.mrf.mxu0
        %v846 = vadd.f32 %v747, %v845
        %v847 = vpop.f32.mrf.mxu0
        %848 = vmatprep.mubr.f32.mxu0 0.0
        %849 = vmatmul.mubr.f32.gmra.mxu0 %v768
        %v850 = vpop.f32.mrf.mxu0
        %v851 = vadd.f32 %v752, %v850
        %v852 = vpop.f32.mrf.mxu0
        %853 = vmatprep.mubr.f32.mxu0 0.0
        %854 = vmatmul.mubr.f32.gmra.mxu0 %v771
        %v855 = vpop.f32.mrf.mxu0
        %v856 = vadd.f32 %v757, %v855
        %v857 = vpop.f32.mrf.mxu0
        %858 = vmatprep.mubr.f32.mxu0 0.0
        %859 = vmatmul.mubr.f32.gmra.mxu0 %v774
        %v860 = vpop.f32.mrf.mxu0
        %v861 = vadd.f32 %v762, %v860
        %v862 = vpop.f32.mrf.mxu0
        %863 = vdwg.mxu0
        %864 = vxpose.xlu0.b32.start [1/16] %v606, 128
        %865 = vxpose.xlu0.b32.cont [2/16] 0.0, 128
        %866 = vxpose.xlu0.b32.cont [3/16] 0.0, 128
        %867 = vxpose.xlu0.b32.cont [4/16] 0.0, 128
        %868 = vxpose.xlu0.b32.cont [5/16] 0.0, 128
        %869 = vxpose.xlu0.b32.cont [6/16] 0.0, 128
        %870 = vxpose.xlu0.b32.cont [7/16] 0.0, 128
        %871 = vxpose.xlu0.b32.cont [8/16] 0.0, 128
        %872 = vxpose.xlu0.b32.cont [9/16] 0.0, 128
        %873 = vxpose.xlu0.b32.cont [10/16] 0.0, 128
        %874 = vxpose.xlu0.b32.cont [11/16] 0.0, 128
        %875 = vxpose.xlu0.b32.cont [12/16] 0.0, 128
        %876 = vxpose.xlu0.b32.cont [13/16] 0.0, 128
        %877 = vxpose.xlu0.b32.cont [14/16] 0.0, 128
        %878 = vxpose.xlu0.b32.cont [15/16] 0.0, 128
        %879 = vxpose.xlu0.b32.end [16/16] 0.0, 128
        %v880 = vpop.trf.xlu0
        %v881 = vpop.trf.xlu0
        %v882 = vpop.trf.xlu0
        %v883 = vpop.trf.xlu0
        %v884 = vpop.trf.xlu0
        %v885 = vpop.trf.xlu0
        %v886 = vpop.trf.xlu0
        %v887 = vpop.trf.xlu0
        %v888 = vpop.trf.xlu0
        %v889 = vpop.trf.xlu0
        %v890 = vpop.trf.xlu0
        %v891 = vpop.trf.xlu0
        %v892 = vpop.trf.xlu0
        %v893 = vpop.trf.xlu0
        %v894 = vpop.trf.xlu0
        %v895 = vpop.trf.xlu0
        %vm896 = vcmask 64512
        %v898 = vsel %vm896, %v880, 0
        %900 = vmatprep.subr.mxu0 0.0
        %901 = vmatpush1.msra.mxu0 0.0
        %902 = vmatprep.subr.mxu0 0.0
        %903 = vmatpush1.msra.mxu0 0.0
        %904 = vmatprep.subr.mxu0 0.0
        %905 = vmatpush1.msra.mxu0 0.0
        %906 = vmatprep.subr.mxu0 0.0
        %907 = vmatpush1.msra.mxu0 0.0
        %908 = vmatprep.subr.mxu0 0.0
        %909 = vmatpush1.msra.mxu0 0.0
        %910 = vmatprep.subr.mxu0 0.0
        %911 = vmatpush1.msra.mxu0 0.0
        %912 = vmatprep.subr.mxu0 0.0
        %913 = vmatpush1.msra.mxu0 0.0
        %914 = vmatprep.subr.mxu0 0.0
        %915 = vmatpush1.msra.mxu0 0.0
        %916 = vmatprep.subr.mxu0 0.0
        %917 = vmatpush1.msra.mxu0 0.0
        %918 = vmatprep.subr.mxu0 0.0
        %919 = vmatpush1.msra.mxu0 0.0
        %920 = vmatprep.subr.mxu0 0.0
        %921 = vmatpush1.msra.mxu0 0.0
        %922 = vmatprep.subr.mxu0 0.0
        %923 = vmatpush1.msra.mxu0 0.0
        %924 = vmatprep.subr.mxu0 0.0
        %925 = vmatpush1.msra.mxu0 0.0
        %926 = vmatprep.subr.mxu0 0.0
        %927 = vmatpush1.msra.mxu0 0.0
        %928 = vmatprep.subr.mxu0 0.0
        %929 = vmatpush1.msra.mxu0 0.0
        %930 = vmatprep.subr.mxu0 0.0
        %931 = vmatpush1.msra.mxu0 %v726
        %932 = vmatprep.subr.mxu0 0.0
        %933 = vmatpush2.msra.mxu0 0.0
        %934 = vmatprep.subr.mxu0 0.0
        %935 = vmatpush2.msra.mxu0 0.0
        %936 = vmatprep.subr.mxu0 0.0
        %937 = vmatpush2.msra.mxu0 0.0
        %938 = vmatprep.subr.mxu0 0.0
        %939 = vmatpush2.msra.mxu0 0.0
        %940 = vmatprep.subr.mxu0 0.0
        %941 = vmatpush2.msra.mxu0 0.0
        %942 = vmatprep.subr.mxu0 0.0
        %943 = vmatpush2.msra.mxu0 0.0
        %944 = vmatprep.subr.mxu0 0.0
        %945 = vmatpush2.msra.mxu0 0.0
        %946 = vmatprep.subr.mxu0 0.0
        %947 = vmatpush2.msra.mxu0 0.0
        %948 = vmatprep.subr.mxu0 0.0
        %949 = vmatpush2.msra.mxu0 0.0
        %950 = vmatprep.subr.mxu0 0.0
        %951 = vmatpush2.msra.mxu0 0.0
        %952 = vmatprep.subr.mxu0 0.0
        %953 = vmatpush2.msra.mxu0 0.0
        %954 = vmatprep.subr.mxu0 0.0
        %955 = vmatpush2.msra.mxu0 0.0
        %956 = vmatprep.subr.mxu0 0.0
        %957 = vmatpush2.msra.mxu0 0.0
        %958 = vmatprep.subr.mxu0 0.0
        %959 = vmatpush2.msra.mxu0 0.0
        %960 = vmatprep.subr.mxu0 0.0
        %961 = vmatpush2.msra.mxu0 0.0
        %962 = vmatprep.subr.mxu0 0.0
        %963 = vmatpush2.msra.mxu0 0.0
        %964 = vmatprep.mubr.f32.mxu0 0.0
        %965 = vmatmul.mubr.f32.gmra.mxu0 %v898
        %v966 = vpop.f32.mrf.mxu0
        %v967 = vadd.f32 0.0, %v966
        %v968 = vpop.f32.mrf.mxu0
        %969 = vdwg.mxu0
        %970 = vxpose.xlu0.b32.start [1/16] %v611, 128
        %971 = vxpose.xlu0.b32.cont [2/16] 0.0, 128
        %972 = vxpose.xlu0.b32.cont [3/16] 0.0, 128
        %973 = vxpose.xlu0.b32.cont [4/16] 0.0, 128
        %974 = vxpose.xlu0.b32.cont [5/16] 0.0, 128
        %975 = vxpose.xlu0.b32.cont [6/16] 0.0, 128
        %976 = vxpose.xlu0.b32.cont [7/16] 0.0, 128
        %977 = vxpose.xlu0.b32.cont [8/16] 0.0, 128
        %978 = vxpose.xlu0.b32.cont [9/16] 0.0, 128
        %979 = vxpose.xlu0.b32.cont [10/16] 0.0, 128
        %980 = vxpose.xlu0.b32.cont [11/16] 0.0, 128
        %981 = vxpose.xlu0.b32.cont [12/16] 0.0, 128
        %982 = vxpose.xlu0.b32.cont [13/16] 0.0, 128
        %983 = vxpose.xlu0.b32.cont [14/16] 0.0, 128
        %984 = vxpose.xlu0.b32.cont [15/16] 0.0, 128
        %985 = vxpose.xlu0.b32.end [16/16] 0.0, 128
        %v986 = vpop.trf.xlu0
        %v987 = vpop.trf.xlu0
        %v988 = vpop.trf.xlu0
        %v989 = vpop.trf.xlu0
        %v990 = vpop.trf.xlu0
        %v991 = vpop.trf.xlu0
        %v992 = vpop.trf.xlu0
        %v993 = vpop.trf.xlu0
        %v994 = vpop.trf.xlu0
        %v995 = vpop.trf.xlu0
        %v996 = vpop.trf.xlu0
        %v997 = vpop.trf.xlu0
        %v998 = vpop.trf.xlu0
        %v999 = vpop.trf.xlu0
        %v1000 = vpop.trf.xlu0
        %v1001 = vpop.trf.xlu0
        %v1003 = vsel %vm896, %v986, 0
        %1005 = vmatprep.subr.mxu0 0.0
        %1006 = vmatpush1.msra.mxu0 0.0
        %1007 = vmatprep.subr.mxu0 0.0
        %1008 = vmatpush1.msra.mxu0 0.0
        %1009 = vmatprep.subr.mxu0 0.0
        %1010 = vmatpush1.msra.mxu0 0.0
        %1011 = vmatprep.subr.mxu0 0.0
        %1012 = vmatpush1.msra.mxu0 0.0
        %1013 = vmatprep.subr.mxu0 0.0
        %1014 = vmatpush1.msra.mxu0 0.0
        %1015 = vmatprep.subr.mxu0 0.0
        %1016 = vmatpush1.msra.mxu0 0.0
        %1017 = vmatprep.subr.mxu0 0.0
        %1018 = vmatpush1.msra.mxu0 0.0
        %1019 = vmatprep.subr.mxu0 0.0
        %1020 = vmatpush1.msra.mxu0 0.0
        %1021 = vmatprep.subr.mxu0 0.0
        %1022 = vmatpush1.msra.mxu0 0.0
        %1023 = vmatprep.subr.mxu0 0.0
        %1024 = vmatpush1.msra.mxu0 0.0
        %1025 = vmatprep.subr.mxu0 0.0
        %1026 = vmatpush1.msra.mxu0 0.0
        %1027 = vmatprep.subr.mxu0 0.0
        %1028 = vmatpush1.msra.mxu0 0.0
        %1029 = vmatprep.subr.mxu0 0.0
        %1030 = vmatpush1.msra.mxu0 0.0
        %1031 = vmatprep.subr.mxu0 0.0
        %1032 = vmatpush1.msra.mxu0 0.0
        %1033 = vmatprep.subr.mxu0 0.0
        %1034 = vmatpush1.msra.mxu0 0.0
        %1035 = vmatprep.subr.mxu0 0.0
        %1036 = vmatpush1.msra.mxu0 %v731
        %1037 = vmatprep.subr.mxu0 0.0
        %1038 = vmatpush2.msra.mxu0 0.0
        %1039 = vmatprep.subr.mxu0 0.0
        %1040 = vmatpush2.msra.mxu0 0.0
        %1041 = vmatprep.subr.mxu0 0.0
        %1042 = vmatpush2.msra.mxu0 0.0
        %1043 = vmatprep.subr.mxu0 0.0
        %1044 = vmatpush2.msra.mxu0 0.0
        %1045 = vmatprep.subr.mxu0 0.0
        %1046 = vmatpush2.msra.mxu0 0.0
        %1047 = vmatprep.subr.mxu0 0.0
        %1048 = vmatpush2.msra.mxu0 0.0
        %1049 = vmatprep.subr.mxu0 0.0
        %1050 = vmatpush2.msra.mxu0 0.0
        %1051 = vmatprep.subr.mxu0 0.0
        %1052 = vmatpush2.msra.mxu0 0.0
        %1053 = vmatprep.subr.mxu0 0.0
        %1054 = vmatpush2.msra.mxu0 0.0
        %1055 = vmatprep.subr.mxu0 0.0
        %1056 = vmatpush2.msra.mxu0 0.0
        %1057 = vmatprep.subr.mxu0 0.0
        %1058 = vmatpush2.msra.mxu0 0.0
        %1059 = vmatprep.subr.mxu0 0.0
        %1060 = vmatpush2.msra.mxu0 0.0
        %1061 = vmatprep.subr.mxu0 0.0
        %1062 = vmatpush2.msra.mxu0 0.0
        %1063 = vmatprep.subr.mxu0 0.0
        %1064 = vmatpush2.msra.mxu0 0.0
        %1065 = vmatprep.subr.mxu0 0.0
        %1066 = vmatpush2.msra.mxu0 0.0
        %1067 = vmatprep.subr.mxu0 0.0
        %1068 = vmatpush2.msra.mxu0 0.0
        %1069 = vmatprep.mubr.f32.mxu0 0.0
        %1070 = vmatmul.mubr.f32.gmra.mxu0 %v1003
        %v1071 = vpop.f32.mrf.mxu0
        %v1072 = vadd.f32 0.0, %v1071
        %v1073 = vpop.f32.mrf.mxu0
        %1074 = vdwg.mxu0
        %1075 = vxpose.xlu0.b32.start [1/16] %v616, 128
        %1076 = vxpose.xlu0.b32.cont [2/16] 0.0, 128
        %1077 = vxpose.xlu0.b32.cont [3/16] 0.0, 128
        %1078 = vxpose.xlu0.b32.cont [4/16] 0.0, 128
        %1079 = vxpose.xlu0.b32.cont [5/16] 0.0, 128
        %1080 = vxpose.xlu0.b32.cont [6/16] 0.0, 128
        %1081 = vxpose.xlu0.b32.cont [7/16] 0.0, 128
        %1082 = vxpose.xlu0.b32.cont [8/16] 0.0, 128
        %1083 = vxpose.xlu0.b32.cont [9/16] 0.0, 128
        %1084 = vxpose.xlu0.b32.cont [10/16] 0.0, 128
        %1085 = vxpose.xlu0.b32.cont [11/16] 0.0, 128
        %1086 = vxpose.xlu0.b32.cont [12/16] 0.0, 128
        %1087 = vxpose.xlu0.b32.cont [13/16] 0.0, 128
        %1088 = vxpose.xlu0.b32.cont [14/16] 0.0, 128
        %1089 = vxpose.xlu0.b32.cont [15/16] 0.0, 128
        %1090 = vxpose.xlu0.b32.end [16/16] 0.0, 128
        %v1091 = vpop.trf.xlu0
        %v1092 = vpop.trf.xlu0
        %v1093 = vpop.trf.xlu0
        %v1094 = vpop.trf.xlu0
        %v1095 = vpop.trf.xlu0
        %v1096 = vpop.trf.xlu0
        %v1097 = vpop.trf.xlu0
        %v1098 = vpop.trf.xlu0
        %v1099 = vpop.trf.xlu0
        %v1100 = vpop.trf.xlu0
        %v1101 = vpop.trf.xlu0
        %v1102 = vpop.trf.xlu0
        %v1103 = vpop.trf.xlu0
        %v1104 = vpop.trf.xlu0
        %v1105 = vpop.trf.xlu0
        %v1106 = vpop.trf.xlu0
        %v1108 = vsel %vm896, %v1091, 0
        %1110 = vmatprep.subr.mxu0 0.0
        %1111 = vmatpush1.msra.mxu0 0.0
        %1112 = vmatprep.subr.mxu0 0.0
        %1113 = vmatpush1.msra.mxu0 0.0
        %1114 = vmatprep.subr.mxu0 0.0
        %1115 = vmatpush1.msra.mxu0 0.0
        %1116 = vmatprep.subr.mxu0 0.0
        %1117 = vmatpush1.msra.mxu0 0.0
        %1118 = vmatprep.subr.mxu0 0.0
        %1119 = vmatpush1.msra.mxu0 0.0
        %1120 = vmatprep.subr.mxu0 0.0
        %1121 = vmatpush1.msra.mxu0 0.0
        %1122 = vmatprep.subr.mxu0 0.0
        %1123 = vmatpush1.msra.mxu0 0.0
        %1124 = vmatprep.subr.mxu0 0.0
        %1125 = vmatpush1.msra.mxu0 0.0
        %1126 = vmatprep.subr.mxu0 0.0
        %1127 = vmatpush1.msra.mxu0 0.0
        %1128 = vmatprep.subr.mxu0 0.0
        %1129 = vmatpush1.msra.mxu0 0.0
        %1130 = vmatprep.subr.mxu0 0.0
        %1131 = vmatpush1.msra.mxu0 0.0
        %1132 = vmatprep.subr.mxu0 0.0
        %1133 = vmatpush1.msra.mxu0 0.0
        %1134 = vmatprep.subr.mxu0 0.0
        %1135 = vmatpush1.msra.mxu0 0.0
        %1136 = vmatprep.subr.mxu0 0.0
        %1137 = vmatpush1.msra.mxu0 0.0
        %1138 = vmatprep.subr.mxu0 0.0
        %1139 = vmatpush1.msra.mxu0 0.0
        %1140 = vmatprep.subr.mxu0 0.0
        %1141 = vmatpush1.msra.mxu0 %v736
        %1142 = vmatprep.subr.mxu0 0.0
        %1143 = vmatpush2.msra.mxu0 0.0
        %1144 = vmatprep.subr.mxu0 0.0
        %1145 = vmatpush2.msra.mxu0 0.0
        %1146 = vmatprep.subr.mxu0 0.0
        %1147 = vmatpush2.msra.mxu0 0.0
        %1148 = vmatprep.subr.mxu0 0.0
        %1149 = vmatpush2.msra.mxu0 0.0
        %1150 = vmatprep.subr.mxu0 0.0
        %1151 = vmatpush2.msra.mxu0 0.0
        %1152 = vmatprep.subr.mxu0 0.0
        %1153 = vmatpush2.msra.mxu0 0.0
        %1154 = vmatprep.subr.mxu0 0.0
        %1155 = vmatpush2.msra.mxu0 0.0
        %1156 = vmatprep.subr.mxu0 0.0
        %1157 = vmatpush2.msra.mxu0 0.0
        %1158 = vmatprep.subr.mxu0 0.0
        %1159 = vmatpush2.msra.mxu0 0.0
        %1160 = vmatprep.subr.mxu0 0.0
        %1161 = vmatpush2.msra.mxu0 0.0
        %1162 = vmatprep.subr.mxu0 0.0
        %1163 = vmatpush2.msra.mxu0 0.0
        %1164 = vmatprep.subr.mxu0 0.0
        %1165 = vmatpush2.msra.mxu0 0.0
        %1166 = vmatprep.subr.mxu0 0.0
        %1167 = vmatpush2.msra.mxu0 0.0
        %1168 = vmatprep.subr.mxu0 0.0
        %1169 = vmatpush2.msra.mxu0 0.0
        %1170 = vmatprep.subr.mxu0 0.0
        %1171 = vmatpush2.msra.mxu0 0.0
        %1172 = vmatprep.subr.mxu0 0.0
        %1173 = vmatpush2.msra.mxu0 0.0
        %1174 = vmatprep.mubr.f32.mxu0 0.0
        %1175 = vmatmul.mubr.f32.gmra.mxu0 %v1108
        %v1176 = vpop.f32.mrf.mxu0
        %v1177 = vadd.f32 0.0, %v1176
        %v1178 = vpop.f32.mrf.mxu0
        %1179 = vdwg.mxu0
        %1180 = vxpose.xlu0.b32.start [1/16] %v621, 128
        %1181 = vxpose.xlu0.b32.cont [2/16] 0.0, 128
        %1182 = vxpose.xlu0.b32.cont [3/16] 0.0, 128
        %1183 = vxpose.xlu0.b32.cont [4/16] 0.0, 128
        %1184 = vxpose.xlu0.b32.cont [5/16] 0.0, 128
        %1185 = vxpose.xlu0.b32.cont [6/16] 0.0, 128
        %1186 = vxpose.xlu0.b32.cont [7/16] 0.0, 128
        %1187 = vxpose.xlu0.b32.cont [8/16] 0.0, 128
        %1188 = vxpose.xlu0.b32.cont [9/16] 0.0, 128
        %1189 = vxpose.xlu0.b32.cont [10/16] 0.0, 128
        %1190 = vxpose.xlu0.b32.cont [11/16] 0.0, 128
        %1191 = vxpose.xlu0.b32.cont [12/16] 0.0, 128
        %1192 = vxpose.xlu0.b32.cont [13/16] 0.0, 128
        %1193 = vxpose.xlu0.b32.cont [14/16] 0.0, 128
        %1194 = vxpose.xlu0.b32.cont [15/16] 0.0, 128
        %1195 = vxpose.xlu0.b32.end [16/16] 0.0, 128
        %v1196 = vpop.trf.xlu0
        %v1197 = vpop.trf.xlu0
        %v1198 = vpop.trf.xlu0
        %v1199 = vpop.trf.xlu0
        %v1200 = vpop.trf.xlu0
        %v1201 = vpop.trf.xlu0
        %v1202 = vpop.trf.xlu0
        %v1203 = vpop.trf.xlu0
        %v1204 = vpop.trf.xlu0
        %v1205 = vpop.trf.xlu0
        %v1206 = vpop.trf.xlu0
        %v1207 = vpop.trf.xlu0
        %v1208 = vpop.trf.xlu0
        %v1209 = vpop.trf.xlu0
        %v1210 = vpop.trf.xlu0
        %v1211 = vpop.trf.xlu0
        %v1213 = vsel %vm896, %v1196, 0
        %1215 = vmatprep.subr.mxu0 0.0
        %1216 = vmatpush1.msra.mxu0 0.0
        %1217 = vmatprep.subr.mxu0 0.0
        %1218 = vmatpush1.msra.mxu0 0.0
        %1219 = vmatprep.subr.mxu0 0.0
        %1220 = vmatpush1.msra.mxu0 0.0
        %1221 = vmatprep.subr.mxu0 0.0
        %1222 = vmatpush1.msra.mxu0 0.0
        %1223 = vmatprep.subr.mxu0 0.0
        %1224 = vmatpush1.msra.mxu0 0.0
        %1225 = vmatprep.subr.mxu0 0.0
        %1226 = vmatpush1.msra.mxu0 0.0
        %1227 = vmatprep.subr.mxu0 0.0
        %1228 = vmatpush1.msra.mxu0 0.0
        %1229 = vmatprep.subr.mxu0 0.0
        %1230 = vmatpush1.msra.mxu0 0.0
        %1231 = vmatprep.subr.mxu0 0.0
        %1232 = vmatpush1.msra.mxu0 0.0
        %1233 = vmatprep.subr.mxu0 0.0
        %1234 = vmatpush1.msra.mxu0 0.0
        %1235 = vmatprep.subr.mxu0 0.0
        %1236 = vmatpush1.msra.mxu0 0.0
        %1237 = vmatprep.subr.mxu0 0.0
        %1238 = vmatpush1.msra.mxu0 0.0
        %1239 = vmatprep.subr.mxu0 0.0
        %1240 = vmatpush1.msra.mxu0 0.0
        %1241 = vmatprep.subr.mxu0 0.0
        %1242 = vmatpush1.msra.mxu0 0.0
        %1243 = vmatprep.subr.mxu0 0.0
        %1244 = vmatpush1.msra.mxu0 0.0
        %1245 = vmatprep.subr.mxu0 0.0
        %1246 = vmatpush1.msra.mxu0 %v741
        %1247 = vmatprep.subr.mxu0 0.0
        %1248 = vmatpush2.msra.mxu0 0.0
        %1249 = vmatprep.subr.mxu0 0.0
        %1250 = vmatpush2.msra.mxu0 0.0
        %1251 = vmatprep.subr.mxu0 0.0
        %1252 = vmatpush2.msra.mxu0 0.0
        %1253 = vmatprep.subr.mxu0 0.0
        %1254 = vmatpush2.msra.mxu0 0.0
        %1255 = vmatprep.subr.mxu0 0.0
        %1256 = vmatpush2.msra.mxu0 0.0
        %1257 = vmatprep.subr.mxu0 0.0
        %1258 = vmatpush2.msra.mxu0 0.0
        %1259 = vmatprep.subr.mxu0 0.0
        %1260 = vmatpush2.msra.mxu0 0.0
        %1261 = vmatprep.subr.mxu0 0.0
        %1262 = vmatpush2.msra.mxu0 0.0
        %1263 = vmatprep.subr.mxu0 0.0
        %1264 = vmatpush2.msra.mxu0 0.0
        %1265 = vmatprep.subr.mxu0 0.0
        %1266 = vmatpush2.msra.mxu0 0.0
        %1267 = vmatprep.subr.mxu0 0.0
        %1268 = vmatpush2.msra.mxu0 0.0
        %1269 = vmatprep.subr.mxu0 0.0
        %1270 = vmatpush2.msra.mxu0 0.0
        %1271 = vmatprep.subr.mxu0 0.0
        %1272 = vmatpush2.msra.mxu0 0.0
        %1273 = vmatprep.subr.mxu0 0.0
        %1274 = vmatpush2.msra.mxu0 0.0
        %1275 = vmatprep.subr.mxu0 0.0
        %1276 = vmatpush2.msra.mxu0 0.0
        %1277 = vmatprep.subr.mxu0 0.0
        %1278 = vmatpush2.msra.mxu0 0.0
        %1279 = vmatprep.mubr.f32.mxu0 0.0
        %1280 = vmatmul.mubr.f32.gmra.mxu0 %v1213
        %v1281 = vpop.f32.mrf.mxu0
        %v1282 = vadd.f32 0.0, %v1281
        %v1283 = vpop.f32.mrf.mxu0
        %1284 = vdwg.mxu0
        %v1285 = vsel %vm896, %v967, -inf
        %1286 = vmax.xlane.f32.xlu0 %v1285
        %v1287 = vpop.xlane.xlu0 %1286
        %v1288 = vsel %vm896, %v1072, -inf
        %1289 = vmax.xlane.f32.xlu0 %v1288
        %v1290 = vpop.xlane.xlu0 %1289
        %v1291 = vsel %vm896, %v1177, -inf
        %1292 = vmax.xlane.f32.xlu0 %v1291
        %v1293 = vpop.xlane.xlu0 %1292
        %v1294 = vsel %vm896, %v1282, -inf
        %1295 = vmax.xlane.f32.xlu0 %v1294
        %v1296 = vpop.xlane.xlu0 %1295
        %v1297 = vsub.f32 %v967, %v1287
        %v1298 = vsub.f32 %v1072, %v1290
        %v1299 = vsub.f32 %v1177, %v1293
        %v1300 = vsub.f32 %v1282, %v1296
        %v1301 = vmul.f32 %v1297, 1.442695
        %v1302 = vpow.pop %v1301
        %v1303 = vmul.f32 %v1298, 1.442695
        %v1304 = vpow.pop %v1303
        %v1305 = vmul.f32 %v1299, 1.442695
        %v1306 = vpow.pop %v1305
        %v1307 = vmul.f32 %v1300, 1.442695
        %v1308 = vpow.pop %v1307
        %v1309 = vsel %vm896, %v1302, 0.0
        %1310 = vadd.xlane.f32.xlu0 %v1309
        %v1311 = vpop.xlane.xlu0 %1310
        %v1312 = vsel %vm896, %v1304, 0.0
        %1313 = vadd.xlane.f32.xlu0 %v1312
        %v1314 = vpop.xlane.xlu0 %1313
        %v1315 = vsel %vm896, %v1306, 0.0
        %1316 = vadd.xlane.f32.xlu0 %v1315
        %v1317 = vpop.xlane.xlu0 %1316
        %v1318 = vsel %vm896, %v1308, 0.0
        %1319 = vadd.xlane.f32.xlu0 %v1318
        %v1320 = vpop.xlane.xlu0 %1319
        %v1321 = vrcp.pop %v1311
        %v1322 = vrcp.pop %v1314
        %v1323 = vrcp.pop %v1317
        %v1324 = vrcp.pop %v1320
        %v1325 = vmul.f32 %v1302, %v1321
        %v1326 = vmul.f32 %v1304, %v1322
        %v1327 = vmul.f32 %v1306, %v1323
        %v1328 = vmul.f32 %v1308, %v1324
        %v1330 = vsel %vm896, %v1325, 0
        %v1333 = vsel %vm896, %v846, 0
        %1335 = vmatprep.subr.mxu0 0.0
        %1336 = vmatpush1.xpose.msra.mxu0 0.0
        %1337 = vmatprep.subr.mxu0 0.0
        %1338 = vmatpush1.xpose.msra.mxu0 0.0
        %1339 = vmatprep.subr.mxu0 0.0
        %1340 = vmatpush1.xpose.msra.mxu0 0.0
        %1341 = vmatprep.subr.mxu0 0.0
        %1342 = vmatpush1.xpose.msra.mxu0 0.0
        %1343 = vmatprep.subr.mxu0 0.0
        %1344 = vmatpush1.xpose.msra.mxu0 0.0
        %1345 = vmatprep.subr.mxu0 0.0
        %1346 = vmatpush1.xpose.msra.mxu0 0.0
        %1347 = vmatprep.subr.mxu0 0.0
        %1348 = vmatpush1.xpose.msra.mxu0 0.0
        %1349 = vmatprep.subr.mxu0 0.0
        %1350 = vmatpush1.xpose.msra.mxu0 0.0
        %1351 = vmatprep.subr.mxu0 0.0
        %1352 = vmatpush1.xpose.msra.mxu0 0.0
        %1353 = vmatprep.subr.mxu0 0.0
        %1354 = vmatpush1.xpose.msra.mxu0 0.0
        %1355 = vmatprep.subr.mxu0 0.0
        %1356 = vmatpush1.xpose.msra.mxu0 0.0
        %1357 = vmatprep.subr.mxu0 0.0
        %1358 = vmatpush1.xpose.msra.mxu0 0.0
        %1359 = vmatprep.subr.mxu0 0.0
        %1360 = vmatpush1.xpose.msra.mxu0 0.0
        %1361 = vmatprep.subr.mxu0 0.0
        %1362 = vmatpush1.xpose.msra.mxu0 0.0
        %1363 = vmatprep.subr.mxu0 0.0
        %1364 = vmatpush1.xpose.msra.mxu0 0.0
        %1365 = vmatprep.subr.mxu0 0.0
        %1366 = vmatpush1.xpose.msra.mxu0 %v1333
        %1367 = vmatprep.subr.mxu0 0.0
        %1368 = vmatpush2.xpose.msra.mxu0 0.0
        %1369 = vmatprep.subr.mxu0 0.0
        %1370 = vmatpush2.xpose.msra.mxu0 0.0
        %1371 = vmatprep.subr.mxu0 0.0
        %1372 = vmatpush2.xpose.msra.mxu0 0.0
        %1373 = vmatprep.subr.mxu0 0.0
        %1374 = vmatpush2.xpose.msra.mxu0 0.0
        %1375 = vmatprep.subr.mxu0 0.0
        %1376 = vmatpush2.xpose.msra.mxu0 0.0
        %1377 = vmatprep.subr.mxu0 0.0
        %1378 = vmatpush2.xpose.msra.mxu0 0.0
        %1379 = vmatprep.subr.mxu0 0.0
        %1380 = vmatpush2.xpose.msra.mxu0 0.0
        %1381 = vmatprep.subr.mxu0 0.0
        %1382 = vmatpush2.xpose.msra.mxu0 0.0
        %1383 = vmatprep.subr.mxu0 0.0
        %1384 = vmatpush2.xpose.msra.mxu0 0.0
        %1385 = vmatprep.subr.mxu0 0.0
        %1386 = vmatpush2.xpose.msra.mxu0 0.0
        %1387 = vmatprep.subr.mxu0 0.0
        %1388 = vmatpush2.xpose.msra.mxu0 0.0
        %1389 = vmatprep.subr.mxu0 0.0
        %1390 = vmatpush2.xpose.msra.mxu0 0.0
        %1391 = vmatprep.subr.mxu0 0.0
        %1392 = vmatpush2.xpose.msra.mxu0 0.0
        %1393 = vmatprep.subr.mxu0 0.0
        %1394 = vmatpush2.xpose.msra.mxu0 0.0
        %1395 = vmatprep.subr.mxu0 0.0
        %1396 = vmatpush2.xpose.msra.mxu0 0.0
        %1397 = vmatprep.subr.mxu0 0.0
        %1398 = vmatpush2.xpose.msra.mxu0 0.0
        %1399 = vmatprep.mubr.f32.mxu0 0.0
        %1400 = vmatmul.mubr.f32.gmra.mxu0 %v1330
        %v1401 = vpop.f32.mrf.mxu0
        %v1402 = vadd.f32 0.0, %v1401
        %v1403 = vpop.f32.mrf.mxu0
        %1404 = vdwg.mxu0
        %v1406 = vsel %vm896, %v1326, 0
        %v1409 = vsel %vm896, %v851, 0
        %1411 = vmatprep.subr.mxu0 0.0
        %1412 = vmatpush1.xpose.msra.mxu0 0.0
        %1413 = vmatprep.subr.mxu0 0.0
        %1414 = vmatpush1.xpose.msra.mxu0 0.0
        %1415 = vmatprep.subr.mxu0 0.0
        %1416 = vmatpush1.xpose.msra.mxu0 0.0
        %1417 = vmatprep.subr.mxu0 0.0
        %1418 = vmatpush1.xpose.msra.mxu0 0.0
        %1419 = vmatprep.subr.mxu0 0.0
        %1420 = vmatpush1.xpose.msra.mxu0 0.0
        %1421 = vmatprep.subr.mxu0 0.0
        %1422 = vmatpush1.xpose.msra.mxu0 0.0
        %1423 = vmatprep.subr.mxu0 0.0
        %1424 = vmatpush1.xpose.msra.mxu0 0.0
        %1425 = vmatprep.subr.mxu0 0.0
        %1426 = vmatpush1.xpose.msra.mxu0 0.0
        %1427 = vmatprep.subr.mxu0 0.0
        %1428 = vmatpush1.xpose.msra.mxu0 0.0
        %1429 = vmatprep.subr.mxu0 0.0
        %1430 = vmatpush1.xpose.msra.mxu0 0.0
        %1431 = vmatprep.subr.mxu0 0.0
        %1432 = vmatpush1.xpose.msra.mxu0 0.0
        %1433 = vmatprep.subr.mxu0 0.0
        %1434 = vmatpush1.xpose.msra.mxu0 0.0
        %1435 = vmatprep.subr.mxu0 0.0
        %1436 = vmatpush1.xpose.msra.mxu0 0.0
        %1437 = vmatprep.subr.mxu0 0.0
        %1438 = vmatpush1.xpose.msra.mxu0 0.0
        %1439 = vmatprep.subr.mxu0 0.0
        %1440 = vmatpush1.xpose.msra.mxu0 0.0
        %1441 = vmatprep.subr.mxu0 0.0
        %1442 = vmatpush1.xpose.msra.mxu0 %v1409
        %1443 = vmatprep.subr.mxu0 0.0
        %1444 = vmatpush2.xpose.msra.mxu0 0.0
        %1445 = vmatprep.subr.mxu0 0.0
        %1446 = vmatpush2.xpose.msra.mxu0 0.0
        %1447 = vmatprep.subr.mxu0 0.0
        %1448 = vmatpush2.xpose.msra.mxu0 0.0
        %1449 = vmatprep.subr.mxu0 0.0
        %1450 = vmatpush2.xpose.msra.mxu0 0.0
        %1451 = vmatprep.subr.mxu0 0.0
        %1452 = vmatpush2.xpose.msra.mxu0 0.0
        %1453 = vmatprep.subr.mxu0 0.0
        %1454 = vmatpush2.xpose.msra.mxu0 0.0
        %1455 = vmatprep.subr.mxu0 0.0
        %1456 = vmatpush2.xpose.msra.mxu0 0.0
        %1457 = vmatprep.subr.mxu0 0.0
        %1458 = vmatpush2.xpose.msra.mxu0 0.0
        %1459 = vmatprep.subr.mxu0 0.0
        %1460 = vmatpush2.xpose.msra.mxu0 0.0
        %1461 = vmatprep.subr.mxu0 0.0
        %1462 = vmatpush2.xpose.msra.mxu0 0.0
        %1463 = vmatprep.subr.mxu0 0.0
        %1464 = vmatpush2.xpose.msra.mxu0 0.0
        %1465 = vmatprep.subr.mxu0 0.0
        %1466 = vmatpush2.xpose.msra.mxu0 0.0
        %1467 = vmatprep.subr.mxu0 0.0
        %1468 = vmatpush2.xpose.msra.mxu0 0.0
        %1469 = vmatprep.subr.mxu0 0.0
        %1470 = vmatpush2.xpose.msra.mxu0 0.0
        %1471 = vmatprep.subr.mxu0 0.0
        %1472 = vmatpush2.xpose.msra.mxu0 0.0
        %1473 = vmatprep.subr.mxu0 0.0
        %1474 = vmatpush2.xpose.msra.mxu0 0.0
        %1475 = vmatprep.mubr.f32.mxu0 0.0
        %1476 = vmatmul.mubr.f32.gmra.mxu0 %v1406
        %v1477 = vpop.f32.mrf.mxu0
        %v1478 = vadd.f32 0.0, %v1477
        %v1479 = vpop.f32.mrf.mxu0
        %1480 = vdwg.mxu0
        %v1482 = vsel %vm896, %v1327, 0
        %v1485 = vsel %vm896, %v856, 0
        %1487 = vmatprep.subr.mxu0 0.0
        %1488 = vmatpush1.xpose.msra.mxu0 0.0
        %1489 = vmatprep.subr.mxu0 0.0
        %1490 = vmatpush1.xpose.msra.mxu0 0.0
        %1491 = vmatprep.subr.mxu0 0.0
        %1492 = vmatpush1.xpose.msra.mxu0 0.0
        %1493 = vmatprep.subr.mxu0 0.0
        %1494 = vmatpush1.xpose.msra.mxu0 0.0
        %1495 = vmatprep.subr.mxu0 0.0
        %1496 = vmatpush1.xpose.msra.mxu0 0.0
        %1497 = vmatprep.subr.mxu0 0.0
        %1498 = vmatpush1.xpose.msra.mxu0 0.0
        %1499 = vmatprep.subr.mxu0 0.0
        %1500 = vmatpush1.xpose.msra.mxu0 0.0
        %1501 = vmatprep.subr.mxu0 0.0
        %1502 = vmatpush1.xpose.msra.mxu0 0.0
        %1503 = vmatprep.subr.mxu0 0.0
        %1504 = vmatpush1.xpose.msra.mxu0 0.0
        %1505 = vmatprep.subr.mxu0 0.0
        %1506 = vmatpush1.xpose.msra.mxu0 0.0
        %1507 = vmatprep.subr.mxu0 0.0
        %1508 = vmatpush1.xpose.msra.mxu0 0.0
        %1509 = vmatprep.subr.mxu0 0.0
        %1510 = vmatpush1.xpose.msra.mxu0 0.0
        %1511 = vmatprep.subr.mxu0 0.0
        %1512 = vmatpush1.xpose.msra.mxu0 0.0
        %1513 = vmatprep.subr.mxu0 0.0
        %1514 = vmatpush1.xpose.msra.mxu0 0.0
        %1515 = vmatprep.subr.mxu0 0.0
        %1516 = vmatpush1.xpose.msra.mxu0 0.0
        %1517 = vmatprep.subr.mxu0 0.0
        %1518 = vmatpush1.xpose.msra.mxu0 %v1485
        %1519 = vmatprep.subr.mxu0 0.0
        %1520 = vmatpush2.xpose.msra.mxu0 0.0
        %1521 = vmatprep.subr.mxu0 0.0
        %1522 = vmatpush2.xpose.msra.mxu0 0.0
        %1523 = vmatprep.subr.mxu0 0.0
        %1524 = vmatpush2.xpose.msra.mxu0 0.0
        %1525 = vmatprep.subr.mxu0 0.0
        %1526 = vmatpush2.xpose.msra.mxu0 0.0
        %1527 = vmatprep.subr.mxu0 0.0
        %1528 = vmatpush2.xpose.msra.mxu0 0.0
        %1529 = vmatprep.subr.mxu0 0.0
        %1530 = vmatpush2.xpose.msra.mxu0 0.0
        %1531 = vmatprep.subr.mxu0 0.0
        %1532 = vmatpush2.xpose.msra.mxu0 0.0
        %1533 = vmatprep.subr.mxu0 0.0
        %1534 = vmatpush2.xpose.msra.mxu0 0.0
        %1535 = vmatprep.subr.mxu0 0.0
        %1536 = vmatpush2.xpose.msra.mxu0 0.0
        %1537 = vmatprep.subr.mxu0 0.0
        %1538 = vmatpush2.xpose.msra.mxu0 0.0
        %1539 = vmatprep.subr.mxu0 0.0
        %1540 = vmatpush2.xpose.msra.mxu0 0.0
        %1541 = vmatprep.subr.mxu0 0.0
        %1542 = vmatpush2.xpose.msra.mxu0 0.0
        %1543 = vmatprep.subr.mxu0 0.0
        %1544 = vmatpush2.xpose.msra.mxu0 0.0
        %1545 = vmatprep.subr.mxu0 0.0
        %1546 = vmatpush2.xpose.msra.mxu0 0.0
        %1547 = vmatprep.subr.mxu0 0.0
        %1548 = vmatpush2.xpose.msra.mxu0 0.0
        %1549 = vmatprep.subr.mxu0 0.0
        %1550 = vmatpush2.xpose.msra.mxu0 0.0
        %1551 = vmatprep.mubr.f32.mxu0 0.0
        %1552 = vmatmul.mubr.f32.gmra.mxu0 %v1482
        %v1553 = vpop.f32.mrf.mxu0
        %v1554 = vadd.f32 0.0, %v1553
        %v1555 = vpop.f32.mrf.mxu0
        %1556 = vdwg.mxu0
        %v1558 = vsel %vm896, %v1328, 0
        %v1561 = vsel %vm896, %v861, 0
        %1563 = vmatprep.subr.mxu0 0.0
        %1564 = vmatpush1.xpose.msra.mxu0 0.0
        %1565 = vmatprep.subr.mxu0 0.0
        %1566 = vmatpush1.xpose.msra.mxu0 0.0
        %1567 = vmatprep.subr.mxu0 0.0
        %1568 = vmatpush1.xpose.msra.mxu0 0.0
        %1569 = vmatprep.subr.mxu0 0.0
        %1570 = vmatpush1.xpose.msra.mxu0 0.0
        %1571 = vmatprep.subr.mxu0 0.0
        %1572 = vmatpush1.xpose.msra.mxu0 0.0
        %1573 = vmatprep.subr.mxu0 0.0
        %1574 = vmatpush1.xpose.msra.mxu0 0.0
        %1575 = vmatprep.subr.mxu0 0.0
        %1576 = vmatpush1.xpose.msra.mxu0 0.0
        %1577 = vmatprep.subr.mxu0 0.0
        %1578 = vmatpush1.xpose.msra.mxu0 0.0
        %1579 = vmatprep.subr.mxu0 0.0
        %1580 = vmatpush1.xpose.msra.mxu0 0.0
        %1581 = vmatprep.subr.mxu0 0.0
        %1582 = vmatpush1.xpose.msra.mxu0 0.0
        %1583 = vmatprep.subr.mxu0 0.0
        %1584 = vmatpush1.xpose.msra.mxu0 0.0
        %1585 = vmatprep.subr.mxu0 0.0
        %1586 = vmatpush1.xpose.msra.mxu0 0.0
        %1587 = vmatprep.subr.mxu0 0.0
        %1588 = vmatpush1.xpose.msra.mxu0 0.0
        %1589 = vmatprep.subr.mxu0 0.0
        %1590 = vmatpush1.xpose.msra.mxu0 0.0
        %1591 = vmatprep.subr.mxu0 0.0
        %1592 = vmatpush1.xpose.msra.mxu0 0.0
        %1593 = vmatprep.subr.mxu0 0.0
        %1594 = vmatpush1.xpose.msra.mxu0 %v1561
        %1595 = vmatprep.subr.mxu0 0.0
        %1596 = vmatpush2.xpose.msra.mxu0 0.0
        %1597 = vmatprep.subr.mxu0 0.0
        %1598 = vmatpush2.xpose.msra.mxu0 0.0
        %1599 = vmatprep.subr.mxu0 0.0
        %1600 = vmatpush2.xpose.msra.mxu0 0.0
        %1601 = vmatprep.subr.mxu0 0.0
        %1602 = vmatpush2.xpose.msra.mxu0 0.0
        %1603 = vmatprep.subr.mxu0 0.0
        %1604 = vmatpush2.xpose.msra.mxu0 0.0
        %1605 = vmatprep.subr.mxu0 0.0
        %1606 = vmatpush2.xpose.msra.mxu0 0.0
        %1607 = vmatprep.subr.mxu0 0.0
        %1608 = vmatpush2.xpose.msra.mxu0 0.0
        %1609 = vmatprep.subr.mxu0 0.0
        %1610 = vmatpush2.xpose.msra.mxu0 0.0
        %1611 = vmatprep.subr.mxu0 0.0
        %1612 = vmatpush2.xpose.msra.mxu0 0.0
        %1613 = vmatprep.subr.mxu0 0.0
        %1614 = vmatpush2.xpose.msra.mxu0 0.0
        %1615 = vmatprep.subr.mxu0 0.0
        %1616 = vmatpush2.xpose.msra.mxu0 0.0
        %1617 = vmatprep.subr.mxu0 0.0
        %1618 = vmatpush2.xpose.msra.mxu0 0.0
        %1619 = vmatprep.subr.mxu0 0.0
        %1620 = vmatpush2.xpose.msra.mxu0 0.0
        %1621 = vmatprep.subr.mxu0 0.0
        %1622 = vmatpush2.xpose.msra.mxu0 0.0
        %1623 = vmatprep.subr.mxu0 0.0
        %1624 = vmatpush2.xpose.msra.mxu0 0.0
        %1625 = vmatprep.subr.mxu0 0.0
        %1626 = vmatpush2.xpose.msra.mxu0 0.0
        %1627 = vmatprep.mubr.f32.mxu0 0.0
        %1628 = vmatmul.mubr.f32.gmra.mxu0 %v1558
        %v1629 = vpop.f32.mrf.mxu0
        %v1630 = vadd.f32 0.0, %v1629
        %v1631 = vpop.f32.mrf.mxu0
        %1632 = vdwg.mxu0
        %1634 = vrot.lane.b32.xlu0 %v1478, 8
        %v1635 = vpop.permute.xlu0 %1634
        %1638 = vrot.lane.b32.xlu0 %v1554, 16
        %v1639 = vpop.permute.xlu0 %1638
        %1642 = vrot.lane.b32.xlu0 %v1630, 24
        %v1643 = vpop.permute.xlu0 %1642
        %v1645 = vsel %vm896, %v1402, %v1635
        %vm1646 = vcmask 130048
        %v1647 = vsel %vm1646, %v1645, %v1639
        %vm1648 = vcmask 195584
        %v1649 = vsel %vm1648, %v1647, %v1643
        %1650 = vst.msk [vmem:[%s468] sm:$0xff] %vm523, %v1649
        %1651 = vst.msk [vmem:[%s475] sm:$0xff] %vm896, %v1325
        %1652 = vst.msk [vmem:[%s475 + $0x8] sm:$0xff] %vm896, %v1326
        %1653 = vst.msk [vmem:[%s475 + $0x10] sm:$0xff] %vm896, %v1327
        %1654 = vst.msk [vmem:[%s475 + $0x18] sm:$0xff] %vm896, %v1328
        %s1655 = sand.u32 %s262, 1
        %s1656 = scalar_lea.sflag [#allocation4], %s1655
        %s1657 = sand.u32 %s262, 1
        %s1658 = smul.addr %s1657, 8
        %s1659 = scalar_lea.vmem [#allocation8], %s1658
        %s1660 = sand.u32 %s290, 1
        %s1661 = scalar_lea.sflag [#allocation10], %s1660
        %s1662 = sand.u32 %s290, 1
        %s1663 = smul.addr %s1662, 32
        %s1664 = scalar_lea.vmem [#allocation9], %s1663
        // Predicated region
        $region69: #{tpu_custom_call.1} parent=55 // pred_check
          %p1665 = pneg %p272
        $region70: #{tpu_custom_call.1} parent=55 // pred_check_branch
          %1667 = sbr.rel (%p1665) target = $region72
        $region71: #{tpu_custom_call.1} parent=55 // pred_region
          %s1669 = ssub.s32 128, 128
          %1670 = vsyncadd %s1656, %s1669
          %s1671 = sadd.s32 %s39, %s38
          %s1672 = smul.addr %s1671, 128
          %s1673 = scalar_lea.hbm %s9, %s1672
          %s1675 = sshll.u32 %s1659, 4
          %s1676 = int_to_ptr.vmem [resolvable:$true] %s1675
          %1678 = dma.vmem_to_hbm [thread:$0]  %s1676, 128, %s1673, %s1656
        $region72: #{tpu_custom_call.1} parent=55 // pred_fallthru
          _
        // Predicated region
        $region73: #{tpu_custom_call.1} parent=55 // pred_check
          %p1679 = pneg %p300
        $region74: #{tpu_custom_call.1} parent=55 // pred_check_branch
          %1681 = sbr.rel (%p1679) target = $region76
        $region75: #{tpu_custom_call.1} parent=55 // pred_region
          %s1683 = ssub.s32 512, 512
          %1684 = vsyncadd %s1661, %s1683
          %s1685 = smul.addr %s38, 4
          %s1686 = sadd.s32 %s39, %s1685
          %s1687 = smul.addr %s1686, 128
          %s1688 = scalar_lea.hbm %s10, %s1687
          %s1689 = sshll.u32 %s1664, 4
          %s1690 = int_to_ptr.vmem [resolvable:$true] %s1689
          %1695 = dma.vmem_to_hbm [thread:$0]  %s1690, 512, %s1688, %s1661, 128, 128, 8
        $region76: #{tpu_custom_call.1} parent=55 // pred_fallthru
          _
      $region56: #{tpu_custom_call.1} parent=5 // pred_fallthru
        _
      %p1696 = scmp.le.s32.totalorder 2, %s29
      // Predicated region
      $region77: #{tpu_custom_call.1} parent=5 // pred_check
        %p1697 = pneg %p1696
      $region78: #{tpu_custom_call.1} parent=5 // pred_check_branch
        %1699 = sbr.rel (%p1697) target = $region80
      $region79: #{tpu_custom_call.1} parent=5 // pred_region
        %s1700 = ssub.s32 %s29, 2
        // Predicated region
        $region81: #{tpu_custom_call.1} parent=79 // pred_check
          %p1701 = pneg %p278
        $region82: #{tpu_custom_call.1} parent=79 // pred_check_branch
          %1703 = sbr.rel (%p1701) target = $region84
        $region83: #{tpu_custom_call.1} parent=79 // pred_region
          %s1704 = sand.u32 %s263, 1
          %s1705 = scalar_lea.sflag [#allocation4], %s1704
          %s1706 = sand.u32 %s263, 1
          %s1707 = smul.addr %s1706, 8
          %s1708 = scalar_lea.vmem [#allocation8], %s1707
          %1709 = dma.done %s1705, 128
        $region84: #{tpu_custom_call.1} parent=79 // pred_fallthru
          _
        // Predicated region
        $region85: #{tpu_custom_call.1} parent=79 // pred_check
          %p1710 = pneg %p306
        $region86: #{tpu_custom_call.1} parent=79 // pred_check_branch
          %1712 = sbr.rel (%p1710) target = $region88
        $region87: #{tpu_custom_call.1} parent=79 // pred_region
          %s1713 = sand.u32 %s291, 1
          %s1714 = scalar_lea.sflag [#allocation10], %s1713
          %s1715 = sand.u32 %s291, 1
          %s1716 = smul.addr %s1715, 32
          %s1717 = scalar_lea.vmem [#allocation9], %s1716
          %1718 = dma.done %s1714, 512
        $region88: #{tpu_custom_call.1} parent=79 // pred_fallthru
          _
      $region80: #{tpu_custom_call.1} parent=5 // pred_fallthru
        _
    $region6: #{tpu_custom_call.1} parent=1 // loop_footer
      %s33 = sadd.s32 1, %s29
    $region7: #{tpu_custom_call.1} parent=1 // loop_footer_branch
      %28 = sbr.rel target = $region3
    $region8: #{tpu_custom_call.1} parent=1 // loop_exit
      _
    %1719 = vsyncpa [#allocation3], 1
    %s1720 = scalar_lea.sflag [#allocation3], 1
    %1721 = vsyncpa %s1720, 1
    %1722 = vsyncpa [#allocation6], 1
    %s1723 = scalar_lea.sflag [#allocation6], 1
    %1724 = vsyncpa %s1723, 1
    %1725 = vsyncpa [#allocation4], 1
    %s1726 = scalar_lea.sflag [#allocation4], 1
    %1727 = vsyncpa %s1726, 1
    %1728 = vsyncpa [#allocation10], 1
    %s1729 = scalar_lea.sflag [#allocation10], 1
    %1730 = vsyncpa %s1729, 1

</llo_original>
